<compile_context>
chip_gen: v6e
topology: v6e:2x2x1
jax: 0.10.0
libtpu: 0.0.40
codegen_flags: <defaults>
</compile_context>

<pallas_src>
import math
import jax
import jax.numpy as jnp
from jax.experimental import pallas as pl
from jax.experimental.pallas import tpu as pltpu

LANE = 128
MIB = 1024 * 1024


def _round_up(n, m):
    return ((n + m - 1) // m) * m


def _pad_to(x, size, axis):
    pad = size - x.shape[axis]
    if pad <= 0:
        return x
    widths = [(0, 0)] * x.ndim
    widths[axis] = (0, pad)
    return jnp.pad(x, widths)


def _pick_tile(n_pad):
    for t in (512, 256, 128):
        if n_pad % t == 0:
            return t
    return n_pad  # unreachable: n_pad is always a multiple of 128


def _vmem_limit(n_bytes):
    # clamp to [16 MiB, 56 MiB]: valid on v5e/v6e (128 MiB physical) and v7x (64 MiB)
    return int(min(56 * MIB, max(16 * MIB, n_bytes + 4 * MIB)))


# --------------------------------- kernels --------------------------------- #

def _prep_kernel(x_ref, emb_w_ref, emb_b_ref, w1cat_ref, hs1_ref, hw1_ref):
    """embedding_h + layer-1 weight matmuls for one row tile of nodes."""
    f32, bf16 = jnp.float32, jnp.bfloat16
    h = jnp.dot(x_ref[...], emb_w_ref[...], preferred_element_type=f32) + emb_b_ref[...]
    # one 256-wide matmul: h @ [Ws1 | W1]
    hcat = jnp.dot(h.astype(bf16), w1cat_ref[...], preferred_element_type=f32)
    hid = hs1_ref.shape[1]
    hs1_ref[...] = hcat[:, :hid]
    hw1_ref[...] = hcat[:, hid:].astype(bf16)


def _agg_next_kernel(a_ref, hw_ref, hs_ref, ni_ref, b_ref, wnext_ref,
                     hs_next_ref, hw_next_ref, acc_ref):
    """conv-layer aggregation (A_norm @ hW) + ReLU epilogue + next layer's weight matmul."""
    f32, bf16 = jnp.float32, jnp.bfloat16
    k = pl.program_id(1)

    @pl.when(k == 0)
    def _():
        acc_ref[...] = jnp.zeros_like(acc_ref)

    # pure MXU accumulate over source-node tiles
    acc_ref[...] += jnp.dot(a_ref[...], hw_ref[...], preferred_element_type=f32)

    @pl.when(k == pl.num_programs(1) - 1)
    def _():
        # epilogue once per row tile: self branch + in-degree-scaled bias + ReLU
        h = jnp.maximum(hs_ref[...] + acc_ref[...] + ni_ref[...] * b_ref[...], 0.0)
        hcat = jnp.dot(h.astype(bf16), wnext_ref[...], preferred_element_type=f32)
        hid = hs_next_ref.shape[1]
        hs_next_ref[...] = hcat[:, :hid]
        hw_next_ref[...] = hcat[:, hid:].astype(bf16)


def _agg_fc_kernel(a_ref, hw_ref, hs_ref, ni_ref, b_ref, fc_w_ref, fc_b_ref,
                   y_ref, acc_ref):
    """last conv-layer aggregation + ReLU epilogue + final fc."""
    f32, bf16 = jnp.float32, jnp.bfloat16
    k = pl.program_id(1)

    @pl.when(k == 0)
    def _():
        acc_ref[...] = jnp.zeros_like(acc_ref)

    acc_ref[...] += jnp.dot(a_ref[...], hw_ref[...], preferred_element_type=f32)

    @pl.when(k == pl.num_programs(1) - 1)
    def _():
        h = jnp.maximum(hs_ref[...] + acc_ref[...] + ni_ref[...] * b_ref[...], 0.0)
        y_ref[...] = jnp.dot(h.astype(bf16), fc_w_ref[...],
                             preferred_element_type=f32) + fc_b_ref[...]


# --------------------------------- wrapper ---------------------------------- #

def gcn_forward(params, x, a_w, adj_mask):
    f32, bf16 = jnp.float32, jnp.bfloat16
    n = x.shape[0]
    in_feats = params["emb_w"].shape[0]
    hid = params["emb_w"].shape[1]
    out_feats = params["fc_w"].shape[1]

    in_pad = _round_up(in_feats, LANE)
    hid_pad = _round_up(hid, LANE)
    out_pad = _round_up(out_feats, LANE)
    n_pad = _round_up(n, LANE)
    tm = _pick_tile(n_pad)
    tk = tm
    n_row = n_pad // tm
    n_col = n_pad // tk

    # degree normalization from graph structure (unweighted), clamp(min=1), ^-0.5
    out_deg = jnp.clip(adj_mask.sum(axis=0), 1.0, None)   # out_deg[u] = #edges u->*
    in_deg = jnp.clip(adj_mask.sum(axis=1), 1.0, None)    # in_deg[v]  = #edges *->v
    no = jax.lax.rsqrt(out_deg)
    ni = jax.lax.rsqrt(in_deg)

    # Fold both normalizations into the adjacency ONCE (single N^2 pass), shared by
    # both conv layers; zero-pad rows/cols (exact: padded nodes have no edges).
    a_norm = (ni[:, None] * a_w * no[None, :]).astype(bf16)
    a_norm = _pad_to(_pad_to(a_norm, n_pad, 0), n_pad, 1)

    ni_p = _pad_to(ni.reshape(n, 1), n_pad, 0).astype(f32)
    x_p = _pad_to(_pad_to(x.reshape(n, -1), n_pad, 0), in_pad, 1).astype(bf16)

    def pad_w(w, rows, cols):
        return _pad_to(_pad_to(w, rows, 0), cols, 1).astype(bf16)

    def pad_b(b, cols):
        return _pad_to(b.reshape(1, -1), cols, 1).astype(f32)

    emb_w = pad_w(params["emb_w"], in_pad, hid_pad)
    emb_b = pad_b(params["emb_b"], hid_pad)
    w1cat = jnp.concatenate([pad_w(params["c1_ws"], hid_pad, hid_pad),
                             pad_w(params["c1_w"], hid_pad, hid_pad)], axis=1)
    w2cat = jnp.concatenate([pad_w(params["c2_ws"], hid_pad, hid_pad),
                             pad_w(params["c2_w"], hid_pad, hid_pad)], axis=1)
    b1 = pad_b(params["c1_b"], hid_pad)
    b2 = pad_b(params["c2_b"], hid_pad)
    fc_w = pad_w(params["fc_w"], hid_pad, out_pad)
    fc_b = pad_b(params["fc_b"], out_pad)

    # ---- call 1: embedding + layer-1 weight matmuls (row-tiled, megacore parallel) ----
    prep_vmem = (2 * tm * in_pad * 2 + in_pad * hid_pad * 2 + hid_pad * 4
                 + hid_pad * 2 * hid_pad * 2
                 + 2 * tm * hid_pad * 4 + 2 * tm * hid_pad * 2
                 + 3 * tm * hid_pad * 4)
    hs1, hw1 = pl.pallas_call(
        _prep_kernel,
        out_shape=(jax.ShapeDtypeStruct((n_pad, hid_pad), f32),
                   jax.ShapeDtypeStruct((n_pad, hid_pad), bf16)),
        grid=(n_row,),
        in_specs=[
            pl.BlockSpec((tm, in_pad), lambda i: (i, 0)),
            pl.BlockSpec((in_pad, hid_pad), lambda i: (0, 0)),
            pl.BlockSpec((1, hid_pad), lambda i: (0, 0)),
            pl.BlockSpec((hid_pad, 2 * hid_pad), lambda i: (0, 0)),
        ],
        out_specs=(pl.BlockSpec((tm, hid_pad), lambda i: (i, 0)),
                   pl.BlockSpec((tm, hid_pad), lambda i: (i, 0))),
        compiler_params=pltpu.CompilerParams(
            dimension_semantics=("parallel",),
            vmem_limit_bytes=_vmem_limit(prep_vmem)),
    )(x_p, emb_w, emb_b, w1cat)

    # shared specs for the two aggregation calls
    def agg_in_specs(w_cols):
        return [
            pl.BlockSpec((tm, tk), lambda i, k: (i, k)),           # A_norm tile (streamed)
            pl.BlockSpec((tk, hid_pad), lambda i, k: (k, 0)),      # hW tile
            pl.BlockSpec((tm, hid_pad), lambda i, k: (i, 0)),      # h_s (row-resident)
            pl.BlockSpec((tm, 1), lambda i, k: (i, 0)),            # in_deg^-0.5
            pl.BlockSpec((1, hid_pad), lambda i, k: (0, 0)),       # bias
            pl.BlockSpec((hid_pad, w_cols), lambda i, k: (0, 0)),  # next weights
        ]

    agg_vmem = (2 * tm * tk * 2 + 2 * tk * hid_pad * 2
                + tm * hid_pad * 4 + tm * 4
                + hid_pad * 2 * hid_pad * 2
                + tm * hid_pad * 4                       # accumulator scratch
                + 2 * tm * hid_pad * 4 + 2 * tm * hid_pad * 2
                + hid_pad * 4)
    agg_params = pltpu.CompilerParams(
        dimension_semantics=("parallel", "arbitrary"),
        vmem_limit_bytes=_vmem_limit(agg_vmem))

    # ---- call 2: conv1 aggregation + ReLU + layer-2 weight matmuls ----
    hs2, hw2 = pl.pallas_call(
        _agg_next_kernel,
        out_shape=(jax.ShapeDtypeStruct((n_pad, hid_pad), f32),
                   jax.ShapeDtypeStruct((n_pad, hid_pad), bf16)),
        grid=(n_row, n_col),
        in_specs=agg_in_specs(2 * hid_pad),
        out_specs=(pl.BlockSpec((tm, hid_pad), lambda i, k: (i, 0)),
                   pl.BlockSpec((tm, hid_pad), lambda i, k: (i, 0))),
        scratch_shapes=[pltpu.VMEM((tm, hid_pad), f32)],
        compiler_params=agg_params,
    )(a_norm, hw1, hs1, ni_p, b1, w2cat)

    # ---- call 3: conv2 aggregation + ReLU + fc ----
    y_pad = pl.pallas_call(
        _agg_fc_kernel,
        out_shape=jax.ShapeDtypeStruct((n_pad, out_pad), f32),
        grid=(n_row, n_col),
        in_specs=agg_in_specs(out_pad) + [pl.BlockSpec((1, out_pad), lambda i, k: (0, 0))],
        out_specs=pl.BlockSpec((tm, out_pad), lambda i, k: (i, 0)),
        scratch_shapes=[pltpu.VMEM((tm, hid_pad), f32)],
        compiler_params=agg_params,
    )(a_norm, hw2, hs2, ni_p, b2, fc_w, fc_b)

    return y_pad[:n, :out_feats]


# ----------------------------- parameter init ------------------------------ #

def xavier_normal(key, fan_in, fan_out, gain):
    std = gain * math.sqrt(2.0 / (fan_in + fan_out))
    return jax.random.normal(key, (fan_in, fan_out), jnp.float32) * std


def uniform_bias(key, fan_in, fan_out):
    bound = 1.0 / math.sqrt(fan_in)
    return jax.random.uniform(key, (fan_out,), jnp.float32, -bound, bound)


def init_params(key, in_feats, hid_feats, out_feats):
    ks = jax.random.split(key, 10)
    g_relu = math.sqrt(2.0)
    return {
        "emb_w": xavier_normal(ks[0], in_feats, hid_feats, 1.0),
        "emb_b": uniform_bias(ks[1], in_feats, hid_feats),
        "c1_ws": xavier_normal(ks[2], hid_feats, hid_feats, g_relu),
        "c1_w":  xavier_normal(ks[3], hid_feats, hid_feats, g_relu),
        "c1_b":  uniform_bias(ks[4], hid_feats, hid_feats),
        "c2_ws": xavier_normal(ks[5], hid_feats, hid_feats, g_relu),
        "c2_w":  xavier_normal(ks[6], hid_feats, hid_feats, g_relu),
        "c2_b":  uniform_bias(ks[7], hid_feats, hid_feats),
        "fc_w":  xavier_normal(ks[8], hid_feats, out_feats, g_relu),
        "fc_b":  uniform_bias(ks[9], hid_feats, out_feats),
    }


# ------------------------------- references -------------------------------- #

def gcn_forward_ref_f32(params, x, a_w, adj_mask):
    """Pure-JAX f32 reference (exact original-module math)."""
    out_deg = jnp.clip(adj_mask.sum(axis=0), 1.0, None)
    in_deg = jnp.clip(adj_mask.sum(axis=1), 1.0, None)
    no = jax.lax.rsqrt(out_deg)[:, None]
    ni = jax.lax.rsqrt(in_deg)[:, None]
    h = x.reshape(x.shape[0], -1)
    h = h @ params["emb_w"] + params["emb_b"]
    for p in ("c1", "c2"):
        h_s = h @ params[p + "_ws"]
        m = a_w @ (h * no)
        hh = (m @ params[p + "_w"] + params[p + "_b"]) * ni
        h = jnp.maximum(h_s + hh, 0.0)
    return h @ params["fc_w"] + params["fc_b"]


def gcn_forward_ref_bf16(params, x, a_w, adj_mask):
    """Pure-JAX reference emulating the kernel's bf16/f32-acc, reassociated math."""
    bf = jnp.bfloat16
    out_deg = jnp.clip(adj_mask.sum(axis=0), 1.0, None)
    in_deg = jnp.clip(adj_mask.sum(axis=1), 1.0, None)
    no = jax.lax.rsqrt(out_deg)
    ni = jax.lax.rsqrt(in_deg)[:, None]
    a_norm = (ni * a_w * no[None, :]).astype(bf)
    dot = lambda a, b: jnp.dot(a.astype(bf), b.astype(bf),
                               preferred_element_type=jnp.float32)
    h = x.reshape(x.shape[0], -1)
    h = dot(h, params["emb_w"]) + params["emb_b"]
    for p in ("c1", "c2"):
        h_s = dot(h, params[p + "_ws"])
        hw = dot(h, params[p + "_w"])                       # reassociated: A @ (h @ W)
        m = jnp.dot(a_norm, hw.astype(bf), preferred_element_type=jnp.float32)
        h = jnp.maximum(h_s + m + ni * params[p + "_b"], 0.0)
    return dot(h, params["fc_w"]) + params["fc_b"]


# ----------------------------------- main ----------------------------------- #

if __name__ == "__main__":
    N = 16          # number of graph nodes
    IN_FEATS = 8
    HID_FEATS = 32
    OUT_FEATS = 8

    key = jax.random.PRNGKey(0)
    k_x, k_adj, k_ew, k_param = jax.random.split(key, 4)

    # node input features
    x = jax.random.normal(k_x, (N, IN_FEATS), jnp.float32)

    # random directed graph: adjacency mask[v, u] = 1 if edge u -> v exists
    adj_mask = (jax.random.uniform(k_adj, (N, N)) < 0.3).astype(jnp.float32)
    # positive per-edge weights e_w laid into a dense weighted adjacency
    e_w_dense = jax.random.uniform(k_ew, (N, N), jnp.float32, 0.1, 1.0)
    a_w = adj_mask * e_w_dense

    params = init_params(k_param, IN_FEATS, HID_FEATS, OUT_FEATS)

    # dropout layers are identity in eval mode; bn=False path -> no BatchNorm applied.
    gcn_fwd = jax.jit(gcn_forward)
    y = jax.block_until_ready(gcn_fwd(params, x, a_w, adj_mask))
    assert y.shape == (N, OUT_FEATS)

    # exactness vs a reference using the same bf16-input / f32-accumulate, reassociated math
    y_bf = gcn_forward_ref_bf16(params, x, a_w, adj_mask)
    assert jnp.allclose(y, y_bf, atol=1e-2, rtol=1e-2), "mismatch vs bf16-emulating reference"

    # semantic sanity vs the pure-f32 original-module math (bf16 rounding tolerance)
    y_f32 = gcn_forward_ref_f32(params, x, a_w, adj_mask)
    assert jnp.allclose(y, y_f32, atol=2e-1, rtol=2e-1), "mismatch vs f32 reference"

    print("KERNEL_OK")
</pallas_src>

<mosaic_0001>
module attributes {stable_mosaic.version = 11 : i64} {
  func.func @_prep_kernel(%arg0: i32, %arg1: memref<128x128xbf16, #tpu.memory_space<vmem>>, %arg2: memref<128x128xbf16, #tpu.memory_space<vmem>>, %arg3: memref<1x128xf32, #tpu.memory_space<vmem>>, %arg4: memref<128x256xbf16, #tpu.memory_space<vmem>>, %arg5: memref<128x128xf32, #tpu.memory_space<vmem>>, %arg6: memref<128x128xbf16, #tpu.memory_space<vmem>>) attributes {dimension_semantics = [#tpu.dimension_semantics<parallel>], iteration_bounds = array<i64: 1>, scalar_prefetch = 0 : i64, scratch_operands = 0 : i64, tpu.core_type = #tpu.core_type<tc>, window_params = [{transform_indices = @transform_0, window_bounds = array<i64: 128, 128>}, {pipeline_mode = #tpu.pipeline_mode<synchronous>, transform_indices = @transform_1, window_bounds = array<i64: 128, 128>}, {pipeline_mode = #tpu.pipeline_mode<synchronous>, transform_indices = @transform_2, window_bounds = array<i64: 1, 128>}, {pipeline_mode = #tpu.pipeline_mode<synchronous>, transform_indices = @transform_3, window_bounds = array<i64: 128, 256>}, {transform_indices = @transform_4, window_bounds = array<i64: 128, 128>}, {transform_indices = @transform_5, window_bounds = array<i64: 128, 128>}]} {
    %c0 = arith.constant 0 : index
    %c0_0 = arith.constant 0 : index
    %0 = vector.load %arg1[%c0, %c0_0] : memref<128x128xbf16, #tpu.memory_space<vmem>>, vector<128x128xbf16>
    %c0_1 = arith.constant 0 : index
    %c0_2 = arith.constant 0 : index
    %1 = vector.load %arg2[%c0_1, %c0_2] : memref<128x128xbf16, #tpu.memory_space<vmem>>, vector<128x128xbf16>
    %cst = arith.constant dense<0.000000e+00> : vector<128x128xf32>
    %2 = tpu.matmul %0, %1, %cst {dimension_numbers = #tpu.dot_dimension_numbers<[1], [0], [0], [1], [0, 0, 1, 1], [], []>} : vector<128x128xbf16>, vector<128x128xbf16>, vector<128x128xf32> -> vector<128x128xf32>
    %c0_3 = arith.constant 0 : index
    %c0_4 = arith.constant 0 : index
    %3 = vector.load %arg3[%c0_3, %c0_4] : memref<1x128xf32, #tpu.memory_space<vmem>>, vector<1x128xf32>
    %4 = vector.broadcast %3 : vector<1x128xf32> to vector<128x128xf32>
    %5 = arith.addf %2, %4 : vector<128x128xf32>
    %6 = arith.truncf %5 : vector<128x128xf32> to vector<128x128xbf16>
    %c0_5 = arith.constant 0 : index
    %c0_6 = arith.constant 0 : index
    %7 = vector.load %arg4[%c0_5, %c0_6] : memref<128x256xbf16, #tpu.memory_space<vmem>>, vector<128x256xbf16>
    %cst_7 = arith.constant dense<0.000000e+00> : vector<128x256xf32>
    %8 = tpu.matmul %6, %7, %cst_7 {dimension_numbers = #tpu.dot_dimension_numbers<[1], [0], [0], [1], [0, 0, 1, 1], [], []>} : vector<128x128xbf16>, vector<128x256xbf16>, vector<128x256xf32> -> vector<128x256xf32>
    %9 = vector.extract_strided_slice %8 {offsets = [0, 0], sizes = [128, 128], strides = [1, 1]} : vector<128x256xf32> to vector<128x128xf32>
    %c0_8 = arith.constant 0 : index
    %c0_9 = arith.constant 0 : index
    %10 = vector.load %arg5[%c0_8, %c0_9] : memref<128x128xf32, #tpu.memory_space<vmem>>, vector<128x128xf32>
    tpu.vector_store %arg5[%c0_8, %c0_9], %9 {strides = array<i32>} : memref<128x128xf32, #tpu.memory_space<vmem>>, vector<128x128xf32>,
    %11 = vector.extract_strided_slice %8 {offsets = [0, 128], sizes = [128, 128], strides = [1, 1]} : vector<128x256xf32> to vector<128x128xf32>
    %12 = arith.truncf %11 : vector<128x128xf32> to vector<128x128xbf16>
    %c0_10 = arith.constant 0 : index
    %c0_11 = arith.constant 0 : index
    %13 = vector.load %arg6[%c0_10, %c0_11] : memref<128x128xbf16, #tpu.memory_space<vmem>>, vector<128x128xbf16>
    tpu.vector_store %arg6[%c0_10, %c0_11], %12 {strides = array<i32>} : memref<128x128xbf16, #tpu.memory_space<vmem>>, vector<128x128xbf16>,
    return
  }
  func.func @transform_0(%arg0: i32) -> (i32, i32) {
    %c0_i32 = arith.constant 0 : i32
    %c0_i32_0 = arith.constant 0 : i32
    return %arg0, %c0_i32 : i32, i32
  }
  func.func @transform_1(%arg0: i32) -> (i32, i32) {
    %c0_i32 = arith.constant 0 : i32
    %c0_i32_0 = arith.constant 0 : i32
    %c0_i32_1 = arith.constant 0 : i32
    return %c0_i32, %c0_i32_0 : i32, i32
  }
  func.func @transform_2(%arg0: i32) -> (i32, i32) {
    %c0_i32 = arith.constant 0 : i32
    %c0_i32_0 = arith.constant 0 : i32
    %c0_i32_1 = arith.constant 0 : i32
    return %c0_i32, %c0_i32_0 : i32, i32
  }
  func.func @transform_3(%arg0: i32) -> (i32, i32) {
    %c0_i32 = arith.constant 0 : i32
    %c0_i32_0 = arith.constant 0 : i32
    %c0_i32_1 = arith.constant 0 : i32
    return %c0_i32, %c0_i32_0 : i32, i32
  }
  func.func @transform_4(%arg0: i32) -> (i32, i32) {
    %c0_i32 = arith.constant 0 : i32
    %c0_i32_0 = arith.constant 0 : i32
    return %arg0, %c0_i32 : i32, i32
  }
  func.func @transform_5(%arg0: i32) -> (i32, i32) {
    %c0_i32 = arith.constant 0 : i32
    %c0_i32_0 = arith.constant 0 : i32
    return %arg0, %c0_i32 : i32, i32
  }
}

module attributes {stable_mosaic.version = 11 : i64} {
  func.func @_agg_next_kernel(%arg0: i32, %arg1: i32, %arg2: memref<128x128xbf16, #tpu.memory_space<vmem>>, %arg3: memref<128x128xbf16, #tpu.memory_space<vmem>>, %arg4: memref<128x128xf32, #tpu.memory_space<vmem>>, %arg5: memref<128x1xf32, #tpu.memory_space<vmem>>, %arg6: memref<1x128xf32, #tpu.memory_space<vmem>>, %arg7: memref<128x256xbf16, #tpu.memory_space<vmem>>, %arg8: memref<128x128xf32, #tpu.memory_space<vmem>>, %arg9: memref<128x128xbf16, #tpu.memory_space<vmem>>, %arg10: memref<128x128xf32, #tpu.memory_space<vmem>>) attributes {dimension_semantics = [#tpu.dimension_semantics<parallel>, #tpu.dimension_semantics<arbitrary>], iteration_bounds = array<i64: 1, 1>, scalar_prefetch = 0 : i64, scratch_operands = 1 : i64, tpu.core_type = #tpu.core_type<tc>, window_params = [{transform_indices = @transform_0, window_bounds = array<i64: 128, 128>}, {transform_indices = @transform_1, window_bounds = array<i64: 128, 128>}, {transform_indices = @transform_2, window_bounds = array<i64: 128, 128>}, {transform_indices = @transform_3, window_bounds = array<i64: 128, 1>}, {pipeline_mode = #tpu.pipeline_mode<synchronous>, transform_indices = @transform_4, window_bounds = array<i64: 1, 128>}, {pipeline_mode = #tpu.pipeline_mode<synchronous>, transform_indices = @transform_5, window_bounds = array<i64: 128, 256>}, {transform_indices = @transform_6, window_bounds = array<i64: 128, 128>}, {transform_indices = @transform_7, window_bounds = array<i64: 128, 128>}]} {
    %c0_i32 = arith.constant 0 : i32
    %0 = arith.cmpi eq, %arg1, %c0_i32 : i32
    %1 = arith.extui %0 : i1 to i32
    %c0_i32_0 = arith.constant 0 : i32
    %2 = arith.cmpi ne, %1, %c0_i32_0 : i32
    scf.if %2 {
      %cst_10 = arith.constant 0.000000e+00 : f32
      %12 = vector.broadcast %cst_10 : f32 to vector<128x128xf32>
      %c0_11 = arith.constant 0 : index
      %c0_12 = arith.constant 0 : index
      %13 = vector.load %arg10[%c0_11, %c0_12] : memref<128x128xf32, #tpu.memory_space<vmem>>, vector<128x128xf32>
      tpu.vector_store %arg10[%c0_11, %c0_12], %12 {strides = array<i32>} : memref<128x128xf32, #tpu.memory_space<vmem>>, vector<128x128xf32>,
    } else {
    }
    %c0 = arith.constant 0 : index
    %c0_1 = arith.constant 0 : index
    %3 = vector.load %arg10[%c0, %c0_1] : memref<128x128xf32, #tpu.memory_space<vmem>>, vector<128x128xf32>
    %c0_2 = arith.constant 0 : index
    %c0_3 = arith.constant 0 : index
    %4 = vector.load %arg2[%c0_2, %c0_3] : memref<128x128xbf16, #tpu.memory_space<vmem>>, vector<128x128xbf16>
    %c0_4 = arith.constant 0 : index
    %c0_5 = arith.constant 0 : index
    %5 = vector.load %arg3[%c0_4, %c0_5] : memref<128x128xbf16, #tpu.memory_space<vmem>>, vector<128x128xbf16>
    %cst = arith.constant dense<0.000000e+00> : vector<128x128xf32>
    %6 = tpu.matmul %4, %5, %cst {dimension_numbers = #tpu.dot_dimension_numbers<[1], [0], [0], [1], [0, 0, 1, 1], [], []>} : vector<128x128xbf16>, vector<128x128xbf16>, vector<128x128xf32> -> vector<128x128xf32>
    %7 = arith.addf %3, %6 : vector<128x128xf32>
    %c0_6 = arith.constant 0 : index
    %c0_7 = arith.constant 0 : index
    %8 = vector.load %arg10[%c0_6, %c0_7] : memref<128x128xf32, #tpu.memory_space<vmem>>, vector<128x128xf32>
    tpu.vector_store %arg10[%c0_6, %c0_7], %7 {strides = array<i32>} : memref<128x128xf32, #tpu.memory_space<vmem>>, vector<128x128xf32>,
    %c0_i32_8 = arith.constant 0 : i32
    %9 = arith.cmpi eq, %arg1, %c0_i32_8 : i32
    %10 = arith.extui %9 : i1 to i32
    %c0_i32_9 = arith.constant 0 : i32
    %11 = arith.cmpi ne, %10, %c0_i32_9 : i32
    scf.if %11 {
      %c0_10 = arith.constant 0 : index
      %c0_11 = arith.constant 0 : index
      %12 = vector.load %arg4[%c0_10, %c0_11] : memref<128x128xf32, #tpu.memory_space<vmem>>, vector<128x128xf32>
      %c0_12 = arith.constant 0 : index
      %c0_13 = arith.constant 0 : index
      %13 = vector.load %arg10[%c0_12, %c0_13] : memref<128x128xf32, #tpu.memory_space<vmem>>, vector<128x128xf32>
      %14 = arith.addf %12, %13 : vector<128x128xf32>
      %c0_14 = arith.constant 0 : index
      %c0_15 = arith.constant 0 : index
      %15 = vector.load %arg5[%c0_14, %c0_15] : memref<128x1xf32, #tpu.memory_space<vmem>>, vector<128x1xf32>
      %c0_16 = arith.constant 0 : index
      %c0_17 = arith.constant 0 : index
      %16 = vector.load %arg6[%c0_16, %c0_17] : memref<1x128xf32, #tpu.memory_space<vmem>>, vector<1x128xf32>
      %17 = vector.broadcast %15 : vector<128x1xf32> to vector<128x128xf32>
      %18 = vector.broadcast %16 : vector<1x128xf32> to vector<128x128xf32>
      %19 = arith.mulf %17, %18 : vector<128x128xf32>
      %20 = arith.addf %14, %19 : vector<128x128xf32>
      %cst_18 = arith.constant 0.000000e+00 : f32
      %21 = vector.broadcast %cst_18 : f32 to vector<128x128xf32>
      %22 = arith.maximumf %20, %21 : vector<128x128xf32>
      %23 = arith.truncf %22 : vector<128x128xf32> to vector<128x128xbf16>
      %c0_19 = arith.constant 0 : index
      %c0_20 = arith.constant 0 : index
      %24 = vector.load %arg7[%c0_19, %c0_20] : memref<128x256xbf16, #tpu.memory_space<vmem>>, vector<128x256xbf16>
      %cst_21 = arith.constant dense<0.000000e+00> : vector<128x256xf32>
      %25 = tpu.matmul %23, %24, %cst_21 {dimension_numbers = #tpu.dot_dimension_numbers<[1], [0], [0], [1], [0, 0, 1, 1], [], []>} : vector<128x128xbf16>, vector<128x256xbf16>, vector<128x256xf32> -> vector<128x256xf32>
      %26 = vector.extract_strided_slice %25 {offsets = [0, 0], sizes = [128, 128], strides = [1, 1]} : vector<128x256xf32> to vector<128x128xf32>
      %c0_22 = arith.constant 0 : index
      %c0_23 = arith.constant 0 : index
      %27 = vector.load %arg8[%c0_22, %c0_23] : memref<128x128xf32, #tpu.memory_space<vmem>>, vector<128x128xf32>
      tpu.vector_store %arg8[%c0_22, %c0_23], %26 {strides = array<i32>} : memref<128x128xf32, #tpu.memory_space<vmem>>, vector<128x128xf32>,
      %28 = vector.extract_strided_slice %25 {offsets = [0, 128], sizes = [128, 128], strides = [1, 1]} : vector<128x256xf32> to vector<128x128xf32>
      %29 = arith.truncf %28 : vector<128x128xf32> to vector<128x128xbf16>
      %c0_24 = arith.constant 0 : index
      %c0_25 = arith.constant 0 : index
      %30 = vector.load %arg9[%c0_24, %c0_25] : memref<128x128xbf16, #tpu.memory_space<vmem>>, vector<128x128xbf16>
      tpu.vector_store %arg9[%c0_24, %c0_25], %29 {strides = array<i32>} : memref<128x128xbf16, #tpu.memory_space<vmem>>, vector<128x128xbf16>,
    } else {
    }
    return
  }
  func.func @transform_0(%arg0: i32, %arg1: i32) -> (i32, i32) {
    %c0_i32 = arith.constant 0 : i32
    return %arg0, %arg1 : i32, i32
  }
  func.func @transform_1(%arg0: i32, %arg1: i32) -> (i32, i32) {
    %c0_i32 = arith.constant 0 : i32
    %c0_i32_0 = arith.constant 0 : i32
    return %arg1, %c0_i32 : i32, i32
  }
  func.func @transform_2(%arg0: i32, %arg1: i32) -> (i32, i32) {
    %c0_i32 = arith.constant 0 : i32
    %c0_i32_0 = arith.constant 0 : i32
    return %arg0, %c0_i32 : i32, i32
  }
  func.func @transform_3(%arg0: i32, %arg1: i32) -> (i32, i32) {
    %c0_i32 = arith.constant 0 : i32
    %c0_i32_0 = arith.constant 0 : i32
    return %arg0, %c0_i32 : i32, i32
  }
  func.func @transform_4(%arg0: i32, %arg1: i32) -> (i32, i32) {
    %c0_i32 = arith.constant 0 : i32
    %c0_i32_0 = arith.constant 0 : i32
    %c0_i32_1 = arith.constant 0 : i32
    return %c0_i32, %c0_i32_0 : i32, i32
  }
  func.func @transform_5(%arg0: i32, %arg1: i32) -> (i32, i32) {
    %c0_i32 = arith.constant 0 : i32
    %c0_i32_0 = arith.constant 0 : i32
    %c0_i32_1 = arith.constant 0 : i32
    return %c0_i32, %c0_i32_0 : i32, i32
  }
  func.func @transform_6(%arg0: i32, %arg1: i32) -> (i32, i32) {
    %c0_i32 = arith.constant 0 : i32
    %c0_i32_0 = arith.constant 0 : i32
    return %arg0, %c0_i32 : i32, i32
  }
  func.func @transform_7(%arg0: i32, %arg1: i32) -> (i32, i32) {
    %c0_i32 = arith.constant 0 : i32
    %c0_i32_0 = arith.constant 0 : i32
    return %arg0, %c0_i32 : i32, i32
  }
}

module attributes {stable_mosaic.version = 11 : i64} {
  func.func @_agg_fc_kernel(%arg0: i32, %arg1: i32, %arg2: memref<128x128xbf16, #tpu.memory_space<vmem>>, %arg3: memref<128x128xbf16, #tpu.memory_space<vmem>>, %arg4: memref<128x128xf32, #tpu.memory_space<vmem>>, %arg5: memref<128x1xf32, #tpu.memory_space<vmem>>, %arg6: memref<1x128xf32, #tpu.memory_space<vmem>>, %arg7: memref<128x128xbf16, #tpu.memory_space<vmem>>, %arg8: memref<1x128xf32, #tpu.memory_space<vmem>>, %arg9: memref<128x128xf32, #tpu.memory_space<vmem>>, %arg10: memref<128x128xf32, #tpu.memory_space<vmem>>) attributes {dimension_semantics = [#tpu.dimension_semantics<parallel>, #tpu.dimension_semantics<arbitrary>], iteration_bounds = array<i64: 1, 1>, scalar_prefetch = 0 : i64, scratch_operands = 1 : i64, tpu.core_type = #tpu.core_type<tc>, window_params = [{transform_indices = @transform_0, window_bounds = array<i64: 128, 128>}, {transform_indices = @transform_1, window_bounds = array<i64: 128, 128>}, {transform_indices = @transform_2, window_bounds = array<i64: 128, 128>}, {transform_indices = @transform_3, window_bounds = array<i64: 128, 1>}, {pipeline_mode = #tpu.pipeline_mode<synchronous>, transform_indices = @transform_4, window_bounds = array<i64: 1, 128>}, {pipeline_mode = #tpu.pipeline_mode<synchronous>, transform_indices = @transform_5, window_bounds = array<i64: 128, 128>}, {pipeline_mode = #tpu.pipeline_mode<synchronous>, transform_indices = @transform_6, window_bounds = array<i64: 1, 128>}, {transform_indices = @transform_7, window_bounds = array<i64: 128, 128>}]} {
    %c0_i32 = arith.constant 0 : i32
    %0 = arith.cmpi eq, %arg1, %c0_i32 : i32
    %1 = arith.extui %0 : i1 to i32
    %c0_i32_0 = arith.constant 0 : i32
    %2 = arith.cmpi ne, %1, %c0_i32_0 : i32
    scf.if %2 {
      %cst_10 = arith.constant 0.000000e+00 : f32
      %12 = vector.broadcast %cst_10 : f32 to vector<128x128xf32>
      %c0_11 = arith.constant 0 : index
      %c0_12 = arith.constant 0 : index
      %13 = vector.load %arg10[%c0_11, %c0_12] : memref<128x128xf32, #tpu.memory_space<vmem>>, vector<128x128xf32>
      tpu.vector_store %arg10[%c0_11, %c0_12], %12 {strides = array<i32>} : memref<128x128xf32, #tpu.memory_space<vmem>>, vector<128x128xf32>,
    } else {
    }
    %c0 = arith.constant 0 : index
    %c0_1 = arith.constant 0 : index
    %3 = vector.load %arg10[%c0, %c0_1] : memref<128x128xf32, #tpu.memory_space<vmem>>, vector<128x128xf32>
    %c0_2 = arith.constant 0 : index
    %c0_3 = arith.constant 0 : index
    %4 = vector.load %arg2[%c0_2, %c0_3] : memref<128x128xbf16, #tpu.memory_space<vmem>>, vector<128x128xbf16>
    %c0_4 = arith.constant 0 : index
    %c0_5 = arith.constant 0 : index
    %5 = vector.load %arg3[%c0_4, %c0_5] : memref<128x128xbf16, #tpu.memory_space<vmem>>, vector<128x128xbf16>
    %cst = arith.constant dense<0.000000e+00> : vector<128x128xf32>
    %6 = tpu.matmul %4, %5, %cst {dimension_numbers = #tpu.dot_dimension_numbers<[1], [0], [0], [1], [0, 0, 1, 1], [], []>} : vector<128x128xbf16>, vector<128x128xbf16>, vector<128x128xf32> -> vector<128x128xf32>
    %7 = arith.addf %3, %6 : vector<128x128xf32>
    %c0_6 = arith.constant 0 : index
    %c0_7 = arith.constant 0 : index
    %8 = vector.load %arg10[%c0_6, %c0_7] : memref<128x128xf32, #tpu.memory_space<vmem>>, vector<128x128xf32>
    tpu.vector_store %arg10[%c0_6, %c0_7], %7 {strides = array<i32>} : memref<128x128xf32, #tpu.memory_space<vmem>>, vector<128x128xf32>,
    %c0_i32_8 = arith.constant 0 : i32
    %9 = arith.cmpi eq, %arg1, %c0_i32_8 : i32
    %10 = arith.extui %9 : i1 to i32
    %c0_i32_9 = arith.constant 0 : i32
    %11 = arith.cmpi ne, %10, %c0_i32_9 : i32
    scf.if %11 {
      %c0_10 = arith.constant 0 : index
      %c0_11 = arith.constant 0 : index
      %12 = vector.load %arg4[%c0_10, %c0_11] : memref<128x128xf32, #tpu.memory_space<vmem>>, vector<128x128xf32>
      %c0_12 = arith.constant 0 : index
      %c0_13 = arith.constant 0 : index
      %13 = vector.load %arg10[%c0_12, %c0_13] : memref<128x128xf32, #tpu.memory_space<vmem>>, vector<128x128xf32>
      %14 = arith.addf %12, %13 : vector<128x128xf32>
      %c0_14 = arith.constant 0 : index
      %c0_15 = arith.constant 0 : index
      %15 = vector.load %arg5[%c0_14, %c0_15] : memref<128x1xf32, #tpu.memory_space<vmem>>, vector<128x1xf32>
      %c0_16 = arith.constant 0 : index
      %c0_17 = arith.constant 0 : index
      %16 = vector.load %arg6[%c0_16, %c0_17] : memref<1x128xf32, #tpu.memory_space<vmem>>, vector<1x128xf32>
      %17 = vector.broadcast %15 : vector<128x1xf32> to vector<128x128xf32>
      %18 = vector.broadcast %16 : vector<1x128xf32> to vector<128x128xf32>
      %19 = arith.mulf %17, %18 : vector<128x128xf32>
      %20 = arith.addf %14, %19 : vector<128x128xf32>
      %cst_18 = arith.constant 0.000000e+00 : f32
      %21 = vector.broadcast %cst_18 : f32 to vector<128x128xf32>
      %22 = arith.maximumf %20, %21 : vector<128x128xf32>
      %23 = arith.truncf %22 : vector<128x128xf32> to vector<128x128xbf16>
      %c0_19 = arith.constant 0 : index
      %c0_20 = arith.constant 0 : index
      %24 = vector.load %arg7[%c0_19, %c0_20] : memref<128x128xbf16, #tpu.memory_space<vmem>>, vector<128x128xbf16>
      %cst_21 = arith.constant dense<0.000000e+00> : vector<128x128xf32>
      %25 = tpu.matmul %23, %24, %cst_21 {dimension_numbers = #tpu.dot_dimension_numbers<[1], [0], [0], [1], [0, 0, 1, 1], [], []>} : vector<128x128xbf16>, vector<128x128xbf16>, vector<128x128xf32> -> vector<128x128xf32>
      %c0_22 = arith.constant 0 : index
      %c0_23 = arith.constant 0 : index
      %26 = vector.load %arg8[%c0_22, %c0_23] : memref<1x128xf32, #tpu.memory_space<vmem>>, vector<1x128xf32>
      %27 = vector.broadcast %26 : vector<1x128xf32> to vector<128x128xf32>
      %28 = arith.addf %25, %27 : vector<128x128xf32>
      %c0_24 = arith.constant 0 : index
      %c0_25 = arith.constant 0 : index
      %29 = vector.load %arg9[%c0_24, %c0_25] : memref<128x128xf32, #tpu.memory_space<vmem>>, vector<128x128xf32>
      tpu.vector_store %arg9[%c0_24, %c0_25], %28 {strides = array<i32>} : memref<128x128xf32, #tpu.memory_space<vmem>>, vector<128x128xf32>,
    } else {
    }
    return
  }
  func.func @transform_0(%arg0: i32, %arg1: i32) -> (i32, i32) {
    %c0_i32 = arith.constant 0 : i32
    return %arg0, %arg1 : i32, i32
  }
  func.func @transform_1(%arg0: i32, %arg1: i32) -> (i32, i32) {
    %c0_i32 = arith.constant 0 : i32
    %c0_i32_0 = arith.constant 0 : i32
    return %arg1, %c0_i32 : i32, i32
  }
  func.func @transform_2(%arg0: i32, %arg1: i32) -> (i32, i32) {
    %c0_i32 = arith.constant 0 : i32
    %c0_i32_0 = arith.constant 0 : i32
    return %arg0, %c0_i32 : i32, i32
  }
  func.func @transform_3(%arg0: i32, %arg1: i32) -> (i32, i32) {
    %c0_i32 = arith.constant 0 : i32
    %c0_i32_0 = arith.constant 0 : i32
    return %arg0, %c0_i32 : i32, i32
  }
  func.func @transform_4(%arg0: i32, %arg1: i32) -> (i32, i32) {
    %c0_i32 = arith.constant 0 : i32
    %c0_i32_0 = arith.constant 0 : i32
    %c0_i32_1 = arith.constant 0 : i32
    return %c0_i32, %c0_i32_0 : i32, i32
  }
  func.func @transform_5(%arg0: i32, %arg1: i32) -> (i32, i32) {
    %c0_i32 = arith.constant 0 : i32
    %c0_i32_0 = arith.constant 0 : i32
    %c0_i32_1 = arith.constant 0 : i32
    return %c0_i32, %c0_i32_0 : i32, i32
  }
  func.func @transform_6(%arg0: i32, %arg1: i32) -> (i32, i32) {
    %c0_i32 = arith.constant 0 : i32
    %c0_i32_0 = arith.constant 0 : i32
    %c0_i32_1 = arith.constant 0 : i32
    return %c0_i32, %c0_i32_0 : i32, i32
  }
  func.func @transform_7(%arg0: i32, %arg1: i32) -> (i32, i32) {
    %c0_i32 = arith.constant 0 : i32
    %c0_i32_0 = arith.constant 0 : i32
    return %arg0, %c0_i32 : i32, i32
  }
}

</mosaic_0001>

<llo_original>
// kernel: gcn_forward.3
$region0: #{gcn_forward.3}
  #allocation0 [shape = 'u32[]', space=smem, size = 0x4, offset = 0x4, fixed_abs, tag = 'smem constant byte address 0x4 - core index']
  #allocation1 [shape = 'u32[144,128]{1,0:T(1,128)}', space=vmem, size = 0x12000, scoped, tag = 'internal scratch']
  %s0 = inlined_call_operand.vmem [shape: bf16[128,128], index: 0, kind: input, shape index: {}]
  %s1 = inlined_call_operand.vmem [shape: bf16[128,128], index: 1, kind: input, shape index: {}]
  %s2 = inlined_call_operand.vmem [shape: f32[1,128], index: 2, kind: input, shape index: {}]
  %s3 = inlined_call_operand.vmem [shape: bf16[128,256], index: 3, kind: input, shape index: {}]
  %s4 = inlined_call_operand.vmem [shape: f32[128,128], index: 4, kind: output, shape index: {0}]
  %s5 = inlined_call_operand.vmem [shape: bf16[128,128], index: 5, kind: output, shape index: {1}]
  %6 = xla_tuple %s4, %s5
  %s7 = sld [smem:[#allocation0]]
  $region34: #{gcn_forward.3} parent=0
    _
  %s9 = ssub.s32 1, %s7
  %s10 = scalar_select 0, %s9, %s7
  // Predicated region
  $region2: #{gcn_forward.3} parent=0 // pred_check
    _
  $region3: #{gcn_forward.3} parent=0 // pred_check_branch
    %12 = sbr.rel (0) target = $region5
  $region4: #{gcn_forward.3} parent=0 // pred_region
    _
  $region5: #{gcn_forward.3} parent=0 // pred_fallthru
    _
  // Predicated region
  $region6: #{gcn_forward.3} parent=0 // pred_check
    _
  $region7: #{gcn_forward.3} parent=0 // pred_check_branch
    %14 = sbr.rel (0) target = $region9
  $region8: #{gcn_forward.3} parent=0 // pred_region
    _
  $region9: #{gcn_forward.3} parent=0 // pred_fallthru
    _
  // Predicated region
  $region10: #{gcn_forward.3} parent=0 // pred_check
    _
  $region11: #{gcn_forward.3} parent=0 // pred_check_branch
    %16 = sbr.rel (0) target = $region13
  $region12: #{gcn_forward.3} parent=0 // pred_region
    _
  $region13: #{gcn_forward.3} parent=0 // pred_fallthru
    _
  // Predicated region
  $region14: #{gcn_forward.3} parent=0 // pred_check
    _
  $region15: #{gcn_forward.3} parent=0 // pred_check_branch
    %18 = sbr.rel (0) target = $region17
  $region16: #{gcn_forward.3} parent=0 // pred_region
    _
  $region17: #{gcn_forward.3} parent=0 // pred_fallthru
    _
  %v20 = vld [vmem:[%s0] sm:$0xf]
  %v21 = vld [vmem:[%s0 + $0x4] sm:$0xf]
  %v22 = vld [vmem:[%s0 + $0x8] sm:$0xf]
  %v23 = vld [vmem:[%s0 + $0xc] sm:$0xf]
  %v24 = vld [vmem:[%s0 + $0x10] sm:$0xf]
  %v25 = vld [vmem:[%s0 + $0x14] sm:$0xf]
  %v26 = vld [vmem:[%s0 + $0x18] sm:$0xf]
  %v27 = vld [vmem:[%s0 + $0x1c] sm:$0xf]
  %v28 = vld [vmem:[%s0 + $0x20] sm:$0xf]
  %v29 = vld [vmem:[%s0 + $0x24] sm:$0xf]
  %v30 = vld [vmem:[%s0 + $0x28] sm:$0xf]
  %v31 = vld [vmem:[%s0 + $0x2c] sm:$0xf]
  %v32 = vld [vmem:[%s0 + $0x30] sm:$0xf]
  %v33 = vld [vmem:[%s0 + $0x34] sm:$0xf]
  %v34 = vld [vmem:[%s0 + $0x38] sm:$0xf]
  %v35 = vld [vmem:[%s0 + $0x3c] sm:$0xf]
  %v36 = vld [vmem:[%s1] sm:$0xf]
  %v37 = vld [vmem:[%s1 + $0x4] sm:$0xf]
  %v38 = vld [vmem:[%s1 + $0x8] sm:$0xf]
  %v39 = vld [vmem:[%s1 + $0xc] sm:$0xf]
  %v40 = vld [vmem:[%s1 + $0x10] sm:$0xf]
  %v41 = vld [vmem:[%s1 + $0x14] sm:$0xf]
  %v42 = vld [vmem:[%s1 + $0x18] sm:$0xf]
  %v43 = vld [vmem:[%s1 + $0x1c] sm:$0xf]
  %v44 = vld [vmem:[%s1 + $0x20] sm:$0xf]
  %v45 = vld [vmem:[%s1 + $0x24] sm:$0xf]
  %v46 = vld [vmem:[%s1 + $0x28] sm:$0xf]
  %v47 = vld [vmem:[%s1 + $0x2c] sm:$0xf]
  %v48 = vld [vmem:[%s1 + $0x30] sm:$0xf]
  %v49 = vld [vmem:[%s1 + $0x34] sm:$0xf]
  %v50 = vld [vmem:[%s1 + $0x38] sm:$0xf]
  %v51 = vld [vmem:[%s1 + $0x3c] sm:$0xf]
  %v52 = vld [vmem:[%s2] sm:$0x1]
  %v54 = vlaneseq
  %v55 = vshrl.u32 %v54, 7
  %v56 = vsub.s32 0, %v55
  %v57 = vrot.slane %v52, %v56
  %v75 = vunpack.c.l.b16 %v20
  %v76 = vunpack.c.l.b16 %v21
  %v77 = vunpack.c.l.b16 %v22
  %v78 = vunpack.c.l.b16 %v23
  %v79 = vunpack.c.l.b16 %v24
  %v80 = vunpack.c.l.b16 %v25
  %v81 = vunpack.c.l.b16 %v26
  %v82 = vunpack.c.l.b16 %v27
  %v83 = vunpack.c.l.b16 %v28
  %v84 = vunpack.c.l.b16 %v29
  %v85 = vunpack.c.l.b16 %v30
  %v86 = vunpack.c.l.b16 %v31
  %v87 = vunpack.c.l.b16 %v32
  %v88 = vunpack.c.l.b16 %v33
  %v89 = vunpack.c.l.b16 %v34
  %v90 = vunpack.c.l.b16 %v35
  %v91 = vpack.c.b16 %v76, %v75
  %v92 = vpack.c.b16 %v78, %v77
  %v93 = vpack.c.b16 %v80, %v79
  %v94 = vpack.c.b16 %v82, %v81
  %v95 = vpack.c.b16 %v84, %v83
  %v96 = vpack.c.b16 %v86, %v85
  %v97 = vpack.c.b16 %v88, %v87
  %v98 = vpack.c.b16 %v90, %v89
  %v123 = vunpack.c.l.b16 %v36
  %v124 = vunpack.c.l.b16 %v37
  %v125 = vunpack.c.l.b16 %v38
  %v126 = vunpack.c.l.b16 %v39
  %v127 = vunpack.c.l.b16 %v40
  %v128 = vunpack.c.l.b16 %v41
  %v129 = vunpack.c.l.b16 %v42
  %v130 = vunpack.c.l.b16 %v43
  %v131 = vunpack.c.l.b16 %v44
  %v132 = vunpack.c.l.b16 %v45
  %v133 = vunpack.c.l.b16 %v46
  %v134 = vunpack.c.l.b16 %v47
  %v135 = vunpack.c.l.b16 %v48
  %v136 = vunpack.c.l.b16 %v49
  %v137 = vunpack.c.l.b16 %v50
  %v138 = vunpack.c.l.b16 %v51
  %v139 = vpack.c.b16 %v124, %v123
  %v140 = vpack.c.b16 %v126, %v125
  %v141 = vpack.c.b16 %v128, %v127
  %v142 = vpack.c.b16 %v130, %v129
  %v143 = vpack.c.b16 %v132, %v131
  %v144 = vpack.c.b16 %v134, %v133
  %v145 = vpack.c.b16 %v136, %v135
  %v146 = vpack.c.b16 %v138, %v137
  %155 = vmatprep.subr.bf16.mxu0 0
  %156 = vmatpush1.bf16.msra.mxu0 %v146
  %157 = vmatprep.subr.bf16.mxu0 0
  %158 = vmatpush1.bf16.msra.mxu0 %v145
  %159 = vmatprep.subr.bf16.mxu0 0
  %160 = vmatpush1.bf16.msra.mxu0 %v144
  %161 = vmatprep.subr.bf16.mxu0 0
  %162 = vmatpush1.bf16.msra.mxu0 %v143
  %163 = vmatprep.subr.bf16.mxu0 0
  %164 = vmatpush1.bf16.msra.mxu0 %v142
  %165 = vmatprep.subr.bf16.mxu0 0
  %166 = vmatpush1.bf16.msra.mxu0 %v141
  %167 = vmatprep.subr.bf16.mxu0 0
  %168 = vmatpush1.bf16.msra.mxu0 %v140
  %169 = vmatprep.subr.bf16.mxu0 0
  %170 = vmatpush1.bf16.msra.mxu0 %v139
  %171 = vmatprep.subr.bf16.mxu0 0
  %172 = vmatpush2.bf16.msra.mxu0 0
  %173 = vmatprep.subr.bf16.mxu0 0
  %174 = vmatpush2.bf16.msra.mxu0 0
  %175 = vmatprep.subr.bf16.mxu0 0
  %176 = vmatpush2.bf16.msra.mxu0 0
  %177 = vmatprep.subr.bf16.mxu0 0
  %178 = vmatpush2.bf16.msra.mxu0 0
  %179 = vmatprep.subr.bf16.mxu0 0
  %180 = vmatpush2.bf16.msra.mxu0 0
  %181 = vmatprep.subr.bf16.mxu0 0
  %182 = vmatpush2.bf16.msra.mxu0 0
  %183 = vmatprep.subr.bf16.mxu0 0
  %184 = vmatpush2.bf16.msra.mxu0 0
  %185 = vmatprep.subr.bf16.mxu0 0
  %186 = vmatpush2.bf16.msra.mxu0 0
  %187 = vmatprep.mubr.bf16.mxu0 0
  %188 = vmatmul.mubr.bf16.gmra.mxu0 %v91
  %v189 = vpop.f32.mrf.mxu0
  %v190 = vadd.f32 %v57, %v189
  %v191 = vpop.f32.mrf.mxu0
  %v192 = vpop.f32.mrf.mxu0
  %v193 = vadd.f32 %v57, %v192
  %v194 = vpop.f32.mrf.mxu0
  %195 = vmatprep.mubr.bf16.mxu0 0
  %196 = vmatmul.mubr.bf16.gmra.mxu0 %v92
  %v197 = vpop.f32.mrf.mxu0
  %v198 = vadd.f32 %v57, %v197
  %v199 = vpop.f32.mrf.mxu0
  %v200 = vpop.f32.mrf.mxu0
  %v201 = vadd.f32 %v57, %v200
  %v202 = vpop.f32.mrf.mxu0
  %203 = vmatprep.mubr.bf16.mxu0 0
  %204 = vmatmul.mubr.bf16.gmra.mxu0 %v93
  %v205 = vpop.f32.mrf.mxu0
  %v206 = vadd.f32 %v57, %v205
  %v207 = vpop.f32.mrf.mxu0
  %v208 = vpop.f32.mrf.mxu0
  %v209 = vadd.f32 %v57, %v208
  %v210 = vpop.f32.mrf.mxu0
  %211 = vmatprep.mubr.bf16.mxu0 0
  %212 = vmatmul.mubr.bf16.gmra.mxu0 %v94
  %v213 = vpop.f32.mrf.mxu0
  %v214 = vadd.f32 %v57, %v213
  %v215 = vpop.f32.mrf.mxu0
  %v216 = vpop.f32.mrf.mxu0
  %v217 = vadd.f32 %v57, %v216
  %v218 = vpop.f32.mrf.mxu0
  %219 = vmatprep.mubr.bf16.mxu0 0
  %220 = vmatmul.mubr.bf16.gmra.mxu0 %v95
  %v221 = vpop.f32.mrf.mxu0
  %v222 = vadd.f32 %v57, %v221
  %v223 = vpop.f32.mrf.mxu0
  %v224 = vpop.f32.mrf.mxu0
  %v225 = vadd.f32 %v57, %v224
  %v226 = vpop.f32.mrf.mxu0
  %227 = vmatprep.mubr.bf16.mxu0 0
  %228 = vmatmul.mubr.bf16.gmra.mxu0 %v96
  %v229 = vpop.f32.mrf.mxu0
  %v230 = vadd.f32 %v57, %v229
  %v231 = vpop.f32.mrf.mxu0
  %v232 = vpop.f32.mrf.mxu0
  %v233 = vadd.f32 %v57, %v232
  %v234 = vpop.f32.mrf.mxu0
  %235 = vmatprep.mubr.bf16.mxu0 0
  %236 = vmatmul.mubr.bf16.gmra.mxu0 %v97
  %v237 = vpop.f32.mrf.mxu0
  %v238 = vadd.f32 %v57, %v237
  %v239 = vpop.f32.mrf.mxu0
  %v240 = vpop.f32.mrf.mxu0
  %v241 = vadd.f32 %v57, %v240
  %v242 = vpop.f32.mrf.mxu0
  %243 = vmatprep.mubr.bf16.mxu0 0
  %244 = vmatmul.mubr.bf16.gmra.mxu0 %v98
  %v245 = vpop.f32.mrf.mxu0
  %v246 = vadd.f32 %v57, %v245
  %v247 = vpop.f32.mrf.mxu0
  %v248 = vpop.f32.mrf.mxu0
  %v249 = vadd.f32 %v57, %v248
  %v250 = vpop.f32.mrf.mxu0
  %251 = vdwg.mxu0
  %v252 = vpack.c.bf16 %v193, %v190
  %v253 = vpack.c.bf16 %v201, %v198
  %v254 = vpack.c.bf16 %v209, %v206
  %v255 = vpack.c.bf16 %v217, %v214
  %v256 = vpack.c.bf16 %v225, %v222
  %v257 = vpack.c.bf16 %v233, %v230
  %v258 = vpack.c.bf16 %v241, %v238
  %v259 = vpack.c.bf16 %v249, %v246
  %v260 = vld [vmem:[%s3] sm:$0xff]
  %v261 = vld [vmem:[%s3 + $0x8] sm:$0xff]
  %v262 = vld [vmem:[%s3 + $0x10] sm:$0xff]
  %v263 = vld [vmem:[%s3 + $0x18] sm:$0xff]
  %v264 = vld [vmem:[%s3 + $0x20] sm:$0xff]
  %v265 = vld [vmem:[%s3 + $0x28] sm:$0xff]
  %v266 = vld [vmem:[%s3 + $0x30] sm:$0xff]
  %v267 = vld [vmem:[%s3 + $0x38] sm:$0xff]
  %v268 = vld [vmem:[%s3 + $0x40] sm:$0xff]
  %v269 = vld [vmem:[%s3 + $0x48] sm:$0xff]
  %v270 = vld [vmem:[%s3 + $0x50] sm:$0xff]
  %v271 = vld [vmem:[%s3 + $0x58] sm:$0xff]
  %v272 = vld [vmem:[%s3 + $0x60] sm:$0xff]
  %v273 = vld [vmem:[%s3 + $0x68] sm:$0xff]
  %v274 = vld [vmem:[%s3 + $0x70] sm:$0xff]
  %v275 = vld [vmem:[%s3 + $0x78] sm:$0xff]
  %v292 = vunpack.c.l.b16 %v260
  %v293 = vunpack.c.h.b16 %v260
  %v294 = vunpack.c.l.b16 %v261
  %v295 = vunpack.c.h.b16 %v261
  %v296 = vunpack.c.l.b16 %v262
  %v297 = vunpack.c.h.b16 %v262
  %v298 = vunpack.c.l.b16 %v263
  %v299 = vunpack.c.h.b16 %v263
  %v300 = vunpack.c.l.b16 %v264
  %v301 = vunpack.c.h.b16 %v264
  %v302 = vunpack.c.l.b16 %v265
  %v303 = vunpack.c.h.b16 %v265
  %v304 = vunpack.c.l.b16 %v266
  %v305 = vunpack.c.h.b16 %v266
  %v306 = vunpack.c.l.b16 %v267
  %v307 = vunpack.c.h.b16 %v267
  %v308 = vunpack.c.l.b16 %v268
  %v309 = vunpack.c.h.b16 %v268
  %v310 = vunpack.c.l.b16 %v269
  %v311 = vunpack.c.h.b16 %v269
  %v312 = vunpack.c.l.b16 %v270
  %v313 = vunpack.c.h.b16 %v270
  %v314 = vunpack.c.l.b16 %v271
  %v315 = vunpack.c.h.b16 %v271
  %v316 = vunpack.c.l.b16 %v272
  %v317 = vunpack.c.h.b16 %v272
  %v318 = vunpack.c.l.b16 %v273
  %v319 = vunpack.c.h.b16 %v273
  %v320 = vunpack.c.l.b16 %v274
  %v321 = vunpack.c.h.b16 %v274
  %v322 = vunpack.c.l.b16 %v275
  %v323 = vunpack.c.h.b16 %v275
  %v324 = vpack.c.b16 %v294, %v292
  %v325 = vpack.c.b16 %v295, %v293
  %v326 = vpack.c.b16 %v298, %v296
  %v327 = vpack.c.b16 %v299, %v297
  %v328 = vpack.c.b16 %v302, %v300
  %v329 = vpack.c.b16 %v303, %v301
  %v330 = vpack.c.b16 %v306, %v304
  %v331 = vpack.c.b16 %v307, %v305
  %v332 = vpack.c.b16 %v310, %v308
  %v333 = vpack.c.b16 %v311, %v309
  %v334 = vpack.c.b16 %v314, %v312
  %v335 = vpack.c.b16 %v315, %v313
  %v336 = vpack.c.b16 %v318, %v316
  %v337 = vpack.c.b16 %v319, %v317
  %v338 = vpack.c.b16 %v322, %v320
  %v339 = vpack.c.b16 %v323, %v321
  %356 = vmatprep.subr.bf16.mxu0 %v339
  %357 = vmatpush1.bf16.msra.mxu0 %v338
  %358 = vmatprep.subr.bf16.mxu0 %v337
  %359 = vmatpush1.bf16.msra.mxu0 %v336
  %360 = vmatprep.subr.bf16.mxu0 %v335
  %361 = vmatpush1.bf16.msra.mxu0 %v334
  %362 = vmatprep.subr.bf16.mxu0 %v333
  %363 = vmatpush1.bf16.msra.mxu0 %v332
  %364 = vmatprep.subr.bf16.mxu0 %v331
  %365 = vmatpush1.bf16.msra.mxu0 %v330
  %366 = vmatprep.subr.bf16.mxu0 %v329
  %367 = vmatpush1.bf16.msra.mxu0 %v328
  %368 = vmatprep.subr.bf16.mxu0 %v327
  %369 = vmatpush1.bf16.msra.mxu0 %v326
  %370 = vmatprep.subr.bf16.mxu0 %v325
  %371 = vmatpush1.bf16.msra.mxu0 %v324
  %372 = vmatprep.subr.bf16.mxu0 0
  %373 = vmatpush2.bf16.msra.mxu0 0
  %374 = vmatprep.subr.bf16.mxu0 0
  %375 = vmatpush2.bf16.msra.mxu0 0
  %376 = vmatprep.subr.bf16.mxu0 0
  %377 = vmatpush2.bf16.msra.mxu0 0
  %378 = vmatprep.subr.bf16.mxu0 0
  %379 = vmatpush2.bf16.msra.mxu0 0
  %380 = vmatprep.subr.bf16.mxu0 0
  %381 = vmatpush2.bf16.msra.mxu0 0
  %382 = vmatprep.subr.bf16.mxu0 0
  %383 = vmatpush2.bf16.msra.mxu0 0
  %384 = vmatprep.subr.bf16.mxu0 0
  %385 = vmatpush2.bf16.msra.mxu0 0
  %386 = vmatprep.subr.bf16.mxu0 0
  %387 = vmatpush2.bf16.msra.mxu0 0
  %388 = vmatprep.mubr.bf16.mxu0 0
  %389 = vmatmul.mubr.bf16.gmra.mxu0 %v252
  %v390 = vpop.f32.mrf.mxu0
  %v391 = vadd.f32 0.0, %v390
  %v392 = vpop.f32.mrf.mxu0
  %v393 = vadd.f32 0.0, %v392
  %v394 = vpop.f32.mrf.mxu0
  %v395 = vadd.f32 0.0, %v394
  %v396 = vpop.f32.mrf.mxu0
  %v397 = vadd.f32 0.0, %v396
  %398 = vmatprep.mubr.bf16.mxu0 0
  %399 = vmatmul.mubr.bf16.gmra.mxu0 %v253
  %v400 = vpop.f32.mrf.mxu0
  %v401 = vadd.f32 0.0, %v400
  %v402 = vpop.f32.mrf.mxu0
  %v403 = vadd.f32 0.0, %v402
  %v404 = vpop.f32.mrf.mxu0
  %v405 = vadd.f32 0.0, %v404
  %v406 = vpop.f32.mrf.mxu0
  %v407 = vadd.f32 0.0, %v406
  %408 = vmatprep.mubr.bf16.mxu0 0
  %409 = vmatmul.mubr.bf16.gmra.mxu0 %v254
  %v410 = vpop.f32.mrf.mxu0
  %v411 = vadd.f32 0.0, %v410
  %v412 = vpop.f32.mrf.mxu0
  %v413 = vadd.f32 0.0, %v412
  %v414 = vpop.f32.mrf.mxu0
  %v415 = vadd.f32 0.0, %v414
  %v416 = vpop.f32.mrf.mxu0
  %v417 = vadd.f32 0.0, %v416
  %418 = vmatprep.mubr.bf16.mxu0 0
  %419 = vmatmul.mubr.bf16.gmra.mxu0 %v255
  %v420 = vpop.f32.mrf.mxu0
  %v421 = vadd.f32 0.0, %v420
  %v422 = vpop.f32.mrf.mxu0
  %v423 = vadd.f32 0.0, %v422
  %v424 = vpop.f32.mrf.mxu0
  %v425 = vadd.f32 0.0, %v424
  %v426 = vpop.f32.mrf.mxu0
  %v427 = vadd.f32 0.0, %v426
  %428 = vmatprep.mubr.bf16.mxu0 0
  %429 = vmatmul.mubr.bf16.gmra.mxu0 %v256
  %v430 = vpop.f32.mrf.mxu0
  %v431 = vadd.f32 0.0, %v430
  %v432 = vpop.f32.mrf.mxu0
  %v433 = vadd.f32 0.0, %v432
  %v434 = vpop.f32.mrf.mxu0
  %v435 = vadd.f32 0.0, %v434
  %v436 = vpop.f32.mrf.mxu0
  %v437 = vadd.f32 0.0, %v436
  %438 = vmatprep.mubr.bf16.mxu0 0
  %439 = vmatmul.mubr.bf16.gmra.mxu0 %v257
  %v440 = vpop.f32.mrf.mxu0
  %v441 = vadd.f32 0.0, %v440
  %v442 = vpop.f32.mrf.mxu0
  %v443 = vadd.f32 0.0, %v442
  %v444 = vpop.f32.mrf.mxu0
  %v445 = vadd.f32 0.0, %v444
  %v446 = vpop.f32.mrf.mxu0
  %v447 = vadd.f32 0.0, %v446
  %448 = vmatprep.mubr.bf16.mxu0 0
  %449 = vmatmul.mubr.bf16.gmra.mxu0 %v258
  %v450 = vpop.f32.mrf.mxu0
  %v451 = vadd.f32 0.0, %v450
  %v452 = vpop.f32.mrf.mxu0
  %v453 = vadd.f32 0.0, %v452
  %v454 = vpop.f32.mrf.mxu0
  %v455 = vadd.f32 0.0, %v454
  %v456 = vpop.f32.mrf.mxu0
  %v457 = vadd.f32 0.0, %v456
  %458 = vmatprep.mubr.bf16.mxu0 0
  %459 = vmatmul.mubr.bf16.gmra.mxu0 %v259
  %v460 = vpop.f32.mrf.mxu0
  %v461 = vadd.f32 0.0, %v460
  %v462 = vpop.f32.mrf.mxu0
  %v463 = vadd.f32 0.0, %v462
  %v464 = vpop.f32.mrf.mxu0
  %v465 = vadd.f32 0.0, %v464
  %v466 = vpop.f32.mrf.mxu0
  %v467 = vadd.f32 0.0, %v466
  %468 = vdwg.mxu0
  %469 = vst [vmem:[%s4] sm:$0xff] %v391
  %470 = vst [vmem:[%s4 + $0x8] sm:$0xff] %v395
  %471 = vst [vmem:[%s4 + $0x10] sm:$0xff] %v401
  %472 = vst [vmem:[%s4 + $0x18] sm:$0xff] %v405
  %473 = vst [vmem:[%s4 + $0x20] sm:$0xff] %v411
  %474 = vst [vmem:[%s4 + $0x28] sm:$0xff] %v415
  %475 = vst [vmem:[%s4 + $0x30] sm:$0xff] %v421
  %476 = vst [vmem:[%s4 + $0x38] sm:$0xff] %v425
  %477 = vst [vmem:[%s4 + $0x40] sm:$0xff] %v431
  %478 = vst [vmem:[%s4 + $0x48] sm:$0xff] %v435
  %479 = vst [vmem:[%s4 + $0x50] sm:$0xff] %v441
  %480 = vst [vmem:[%s4 + $0x58] sm:$0xff] %v445
  %481 = vst [vmem:[%s4 + $0x60] sm:$0xff] %v451
  %482 = vst [vmem:[%s4 + $0x68] sm:$0xff] %v455
  %483 = vst [vmem:[%s4 + $0x70] sm:$0xff] %v461
  %484 = vst [vmem:[%s4 + $0x78] sm:$0xff] %v465
  %v485 = vpack.c.bf16 %v397, %v393
  %v486 = vpack.c.bf16 %v407, %v403
  %v487 = vpack.c.bf16 %v417, %v413
  %v488 = vpack.c.bf16 %v427, %v423
  %v489 = vpack.c.bf16 %v437, %v433
  %v490 = vpack.c.bf16 %v447, %v443
  %v491 = vpack.c.bf16 %v457, %v453
  %v492 = vpack.c.bf16 %v467, %v463
  %v501 = vunpack.c.l.b16 %v485
  %v502 = vunpack.c.h.b16 %v485
  %v503 = vunpack.c.l.b16 %v486
  %v504 = vunpack.c.h.b16 %v486
  %v505 = vunpack.c.l.b16 %v487
  %v506 = vunpack.c.h.b16 %v487
  %v507 = vunpack.c.l.b16 %v488
  %v508 = vunpack.c.h.b16 %v488
  %v509 = vunpack.c.l.b16 %v489
  %v510 = vunpack.c.h.b16 %v489
  %v511 = vunpack.c.l.b16 %v490
  %v512 = vunpack.c.h.b16 %v490
  %v513 = vunpack.c.l.b16 %v491
  %v514 = vunpack.c.h.b16 %v491
  %v515 = vunpack.c.l.b16 %v492
  %v516 = vunpack.c.h.b16 %v492
  %v517 = vpack.c.b16 %v501, %v501
  %v518 = vpack.c.b16 %v502, %v502
  %v519 = vpack.c.b16 %v503, %v503
  %v520 = vpack.c.b16 %v504, %v504
  %v521 = vpack.c.b16 %v505, %v505
  %v522 = vpack.c.b16 %v506, %v506
  %v523 = vpack.c.b16 %v507, %v507
  %v524 = vpack.c.b16 %v508, %v508
  %v525 = vpack.c.b16 %v509, %v509
  %v526 = vpack.c.b16 %v510, %v510
  %v527 = vpack.c.b16 %v511, %v511
  %v528 = vpack.c.b16 %v512, %v512
  %v529 = vpack.c.b16 %v513, %v513
  %v530 = vpack.c.b16 %v514, %v514
  %v531 = vpack.c.b16 %v515, %v515
  %v532 = vpack.c.b16 %v516, %v516
  %549 = vst [vmem:[%s5] sm:$0xf] %v517
  %550 = vst [vmem:[%s5 + $0x4] sm:$0xf] %v518
  %551 = vst [vmem:[%s5 + $0x8] sm:$0xf] %v519
  %552 = vst [vmem:[%s5 + $0xc] sm:$0xf] %v520
  %553 = vst [vmem:[%s5 + $0x10] sm:$0xf] %v521
  %554 = vst [vmem:[%s5 + $0x14] sm:$0xf] %v522
  %555 = vst [vmem:[%s5 + $0x18] sm:$0xf] %v523
  %556 = vst [vmem:[%s5 + $0x1c] sm:$0xf] %v524
  %557 = vst [vmem:[%s5 + $0x20] sm:$0xf] %v525
  %558 = vst [vmem:[%s5 + $0x24] sm:$0xf] %v526
  %559 = vst [vmem:[%s5 + $0x28] sm:$0xf] %v527
  %560 = vst [vmem:[%s5 + $0x2c] sm:$0xf] %v528
  %561 = vst [vmem:[%s5 + $0x30] sm:$0xf] %v529
  %562 = vst [vmem:[%s5 + $0x34] sm:$0xf] %v530
  %563 = vst [vmem:[%s5 + $0x38] sm:$0xf] %v531
  %564 = vst [vmem:[%s5 + $0x3c] sm:$0xf] %v532
  // Predicated region
  $region18: #{gcn_forward.3} parent=0 // pred_check
    _
  $region19: #{gcn_forward.3} parent=0 // pred_check_branch
    %566 = sbr.rel (0) target = $region21
  $region20: #{gcn_forward.3} parent=0 // pred_region
    _
  $region21: #{gcn_forward.3} parent=0 // pred_fallthru
    _
  // Predicated region
  $region22: #{gcn_forward.3} parent=0 // pred_check
    _
  $region23: #{gcn_forward.3} parent=0 // pred_check_branch
    %568 = sbr.rel (0) target = $region25
  $region24: #{gcn_forward.3} parent=0 // pred_region
    _
  $region25: #{gcn_forward.3} parent=0 // pred_fallthru
    _
  // Predicated region
  $region26: #{gcn_forward.3} parent=0 // pred_check
    _
  $region27: #{gcn_forward.3} parent=0 // pred_check_branch
    %570 = sbr.rel (0) target = $region29
  $region28: #{gcn_forward.3} parent=0 // pred_region
    _
  $region29: #{gcn_forward.3} parent=0 // pred_fallthru
    _
  // Predicated region
  $region30: #{gcn_forward.3} parent=0 // pred_check
    _
  $region31: #{gcn_forward.3} parent=0 // pred_check_branch
    %572 = sbr.rel (0) target = $region33
  $region32: #{gcn_forward.3} parent=0 // pred_region
    _
  $region33: #{gcn_forward.3} parent=0 // pred_fallthru
    _

// kernel: gcn_forward.5
$region0: #{gcn_forward.5}
  #allocation0 [shape = 'u32[]', space=smem, size = 0x4, offset = 0x4, fixed_abs, tag = 'smem constant byte address 0x4 - core index']
  #allocation1 [shape = 'u32[144,128]{1,0:T(1,128)}', space=vmem, size = 0x12000, scoped, tag = 'internal scratch']
  #allocation2 [shape = 'f32[128,128]{1,0:T(8,128)}', space=vmem, size = 0x10000, scoped, tag = 'scratch operand']
  %s0 = inlined_call_operand.vmem [shape: bf16[128,128], index: 0, kind: input, shape index: {}]
  %s1 = inlined_call_operand.vmem [shape: bf16[128,128], index: 1, kind: input, shape index: {}]
  %s2 = inlined_call_operand.vmem [shape: f32[128,128], index: 2, kind: input, shape index: {}]
  %s3 = inlined_call_operand.vmem [shape: f32[128,1], index: 3, kind: input, shape index: {}]
  %s4 = inlined_call_operand.vmem [shape: f32[1,128], index: 4, kind: input, shape index: {}]
  %s5 = inlined_call_operand.vmem [shape: bf16[128,128], index: 5, kind: input, shape index: {}]
  %s6 = inlined_call_operand.vmem [shape: f32[1,128], index: 6, kind: input, shape index: {}]
  %s7 = inlined_call_operand.vmem [shape: f32[128,128], index: 7, kind: output, shape index: {}]
  %s8 = sld [smem:[#allocation0]]
  $region46: #{gcn_forward.5} parent=0
    _
  %s10 = ssub.s32 1, %s8
  %s11 = scalar_select 0, %s10, %s8
  // Predicated region
  $region2: #{gcn_forward.5} parent=0 // pred_check
    _
  $region3: #{gcn_forward.5} parent=0 // pred_check_branch
    %13 = sbr.rel (0) target = $region5
  $region4: #{gcn_forward.5} parent=0 // pred_region
    _
  $region5: #{gcn_forward.5} parent=0 // pred_fallthru
    _
  // Predicated region
  $region6: #{gcn_forward.5} parent=0 // pred_check
    _
  $region7: #{gcn_forward.5} parent=0 // pred_check_branch
    %15 = sbr.rel (0) target = $region9
  $region8: #{gcn_forward.5} parent=0 // pred_region
    _
  $region9: #{gcn_forward.5} parent=0 // pred_fallthru
    _
  // Predicated region
  $region10: #{gcn_forward.5} parent=0 // pred_check
    _
  $region11: #{gcn_forward.5} parent=0 // pred_check_branch
    %17 = sbr.rel (0) target = $region13
  $region12: #{gcn_forward.5} parent=0 // pred_region
    _
  $region13: #{gcn_forward.5} parent=0 // pred_fallthru
    _
  // Predicated region
  $region14: #{gcn_forward.5} parent=0 // pred_check
    _
  $region15: #{gcn_forward.5} parent=0 // pred_check_branch
    %19 = sbr.rel (0) target = $region17
  $region16: #{gcn_forward.5} parent=0 // pred_region
    _
  $region17: #{gcn_forward.5} parent=0 // pred_fallthru
    _
  // Predicated region
  $region18: #{gcn_forward.5} parent=0 // pred_check
    _
  $region19: #{gcn_forward.5} parent=0 // pred_check_branch
    %21 = sbr.rel (0) target = $region21
  $region20: #{gcn_forward.5} parent=0 // pred_region
    _
  $region21: #{gcn_forward.5} parent=0 // pred_fallthru
    _
  // Predicated region
  $region22: #{gcn_forward.5} parent=0 // pred_check
    _
  $region23: #{gcn_forward.5} parent=0 // pred_check_branch
    %23 = sbr.rel (0) target = $region25
  $region24: #{gcn_forward.5} parent=0 // pred_region
    _
  $region25: #{gcn_forward.5} parent=0 // pred_fallthru
    _
  // Predicated region
  $region26: #{gcn_forward.5} parent=0 // pred_check
    _
  $region27: #{gcn_forward.5} parent=0 // pred_check_branch
    %25 = sbr.rel (0) target = $region29
  $region28: #{gcn_forward.5} parent=0 // pred_region
    _
  $region29: #{gcn_forward.5} parent=0 // pred_fallthru
    _
  %p27 = scmp.eq.s32.totalorder 0, 0
  // Predicated region
  $region30: #{gcn_forward.5} parent=0 // pred_check
    %p28 = pneg %p27
  $region31: #{gcn_forward.5} parent=0 // pred_check_branch
    %30 = sbr.rel (%p28) target = $region33
  $region32: #{gcn_forward.5} parent=0 // pred_region
    %31 = vst [vmem:[#allocation2] sm:$0xff] 0.0
    %32 = vst [vmem:[#allocation2 + $0x8] sm:$0xff] 0.0
    %33 = vst [vmem:[#allocation2 + $0x10] sm:$0xff] 0.0
    %34 = vst [vmem:[#allocation2 + $0x18] sm:$0xff] 0.0
    %35 = vst [vmem:[#allocation2 + $0x20] sm:$0xff] 0.0
    %36 = vst [vmem:[#allocation2 + $0x28] sm:$0xff] 0.0
    %37 = vst [vmem:[#allocation2 + $0x30] sm:$0xff] 0.0
    %38 = vst [vmem:[#allocation2 + $0x38] sm:$0xff] 0.0
    %39 = vst [vmem:[#allocation2 + $0x40] sm:$0xff] 0.0
    %40 = vst [vmem:[#allocation2 + $0x48] sm:$0xff] 0.0
    %41 = vst [vmem:[#allocation2 + $0x50] sm:$0xff] 0.0
    %42 = vst [vmem:[#allocation2 + $0x58] sm:$0xff] 0.0
    %43 = vst [vmem:[#allocation2 + $0x60] sm:$0xff] 0.0
    %44 = vst [vmem:[#allocation2 + $0x68] sm:$0xff] 0.0
    %45 = vst [vmem:[#allocation2 + $0x70] sm:$0xff] 0.0
    %46 = vst [vmem:[#allocation2 + $0x78] sm:$0xff] 0.0
  $region33: #{gcn_forward.5} parent=0 // pred_fallthru
    _
  %v47 = vld [vmem:[#allocation2] sm:$0xff]
  %v48 = vld [vmem:[#allocation2 + $0x8] sm:$0xff]
  %v49 = vld [vmem:[#allocation2 + $0x10] sm:$0xff]
  %v50 = vld [vmem:[#allocation2 + $0x18] sm:$0xff]
  %v51 = vld [vmem:[#allocation2 + $0x20] sm:$0xff]
  %v52 = vld [vmem:[#allocation2 + $0x28] sm:$0xff]
  %v53 = vld [vmem:[#allocation2 + $0x30] sm:$0xff]
  %v54 = vld [vmem:[#allocation2 + $0x38] sm:$0xff]
  %v55 = vld [vmem:[#allocation2 + $0x40] sm:$0xff]
  %v56 = vld [vmem:[#allocation2 + $0x48] sm:$0xff]
  %v57 = vld [vmem:[#allocation2 + $0x50] sm:$0xff]
  %v58 = vld [vmem:[#allocation2 + $0x58] sm:$0xff]
  %v59 = vld [vmem:[#allocation2 + $0x60] sm:$0xff]
  %v60 = vld [vmem:[#allocation2 + $0x68] sm:$0xff]
  %v61 = vld [vmem:[#allocation2 + $0x70] sm:$0xff]
  %v62 = vld [vmem:[#allocation2 + $0x78] sm:$0xff]
  %v63 = vld [vmem:[%s0] sm:$0xf]
  %v64 = vld [vmem:[%s0 + $0x4] sm:$0xf]
  %v65 = vld [vmem:[%s0 + $0x8] sm:$0xf]
  %v66 = vld [vmem:[%s0 + $0xc] sm:$0xf]
  %v67 = vld [vmem:[%s0 + $0x10] sm:$0xf]
  %v68 = vld [vmem:[%s0 + $0x14] sm:$0xf]
  %v69 = vld [vmem:[%s0 + $0x18] sm:$0xf]
  %v70 = vld [vmem:[%s0 + $0x1c] sm:$0xf]
  %v71 = vld [vmem:[%s0 + $0x20] sm:$0xf]
  %v72 = vld [vmem:[%s0 + $0x24] sm:$0xf]
  %v73 = vld [vmem:[%s0 + $0x28] sm:$0xf]
  %v74 = vld [vmem:[%s0 + $0x2c] sm:$0xf]
  %v75 = vld [vmem:[%s0 + $0x30] sm:$0xf]
  %v76 = vld [vmem:[%s0 + $0x34] sm:$0xf]
  %v77 = vld [vmem:[%s0 + $0x38] sm:$0xf]
  %v78 = vld [vmem:[%s0 + $0x3c] sm:$0xf]
  %v79 = vld [vmem:[%s1] sm:$0xf]
  %v80 = vld [vmem:[%s1 + $0x4] sm:$0xf]
  %v81 = vld [vmem:[%s1 + $0x8] sm:$0xf]
  %v82 = vld [vmem:[%s1 + $0xc] sm:$0xf]
  %v83 = vld [vmem:[%s1 + $0x10] sm:$0xf]
  %v84 = vld [vmem:[%s1 + $0x14] sm:$0xf]
  %v85 = vld [vmem:[%s1 + $0x18] sm:$0xf]
  %v86 = vld [vmem:[%s1 + $0x1c] sm:$0xf]
  %v87 = vld [vmem:[%s1 + $0x20] sm:$0xf]
  %v88 = vld [vmem:[%s1 + $0x24] sm:$0xf]
  %v89 = vld [vmem:[%s1 + $0x28] sm:$0xf]
  %v90 = vld [vmem:[%s1 + $0x2c] sm:$0xf]
  %v91 = vld [vmem:[%s1 + $0x30] sm:$0xf]
  %v92 = vld [vmem:[%s1 + $0x34] sm:$0xf]
  %v93 = vld [vmem:[%s1 + $0x38] sm:$0xf]
  %v94 = vld [vmem:[%s1 + $0x3c] sm:$0xf]
  %v111 = vunpack.c.l.b16 %v63
  %v112 = vunpack.c.l.b16 %v64
  %v113 = vunpack.c.l.b16 %v65
  %v114 = vunpack.c.l.b16 %v66
  %v115 = vunpack.c.l.b16 %v67
  %v116 = vunpack.c.l.b16 %v68
  %v117 = vunpack.c.l.b16 %v69
  %v118 = vunpack.c.l.b16 %v70
  %v119 = vunpack.c.l.b16 %v71
  %v120 = vunpack.c.l.b16 %v72
  %v121 = vunpack.c.l.b16 %v73
  %v122 = vunpack.c.l.b16 %v74
  %v123 = vunpack.c.l.b16 %v75
  %v124 = vunpack.c.l.b16 %v76
  %v125 = vunpack.c.l.b16 %v77
  %v126 = vunpack.c.l.b16 %v78
  %v127 = vpack.c.b16 %v112, %v111
  %v128 = vpack.c.b16 %v114, %v113
  %v129 = vpack.c.b16 %v116, %v115
  %v130 = vpack.c.b16 %v118, %v117
  %v131 = vpack.c.b16 %v120, %v119
  %v132 = vpack.c.b16 %v122, %v121
  %v133 = vpack.c.b16 %v124, %v123
  %v134 = vpack.c.b16 %v126, %v125
  %v159 = vunpack.c.l.b16 %v79
  %v160 = vunpack.c.l.b16 %v80
  %v161 = vunpack.c.l.b16 %v81
  %v162 = vunpack.c.l.b16 %v82
  %v163 = vunpack.c.l.b16 %v83
  %v164 = vunpack.c.l.b16 %v84
  %v165 = vunpack.c.l.b16 %v85
  %v166 = vunpack.c.l.b16 %v86
  %v167 = vunpack.c.l.b16 %v87
  %v168 = vunpack.c.l.b16 %v88
  %v169 = vunpack.c.l.b16 %v89
  %v170 = vunpack.c.l.b16 %v90
  %v171 = vunpack.c.l.b16 %v91
  %v172 = vunpack.c.l.b16 %v92
  %v173 = vunpack.c.l.b16 %v93
  %v174 = vunpack.c.l.b16 %v94
  %v175 = vpack.c.b16 %v160, %v159
  %v176 = vpack.c.b16 %v162, %v161
  %v177 = vpack.c.b16 %v164, %v163
  %v178 = vpack.c.b16 %v166, %v165
  %v179 = vpack.c.b16 %v168, %v167
  %v180 = vpack.c.b16 %v170, %v169
  %v181 = vpack.c.b16 %v172, %v171
  %v182 = vpack.c.b16 %v174, %v173
  %191 = vmatprep.subr.bf16.mxu0 0
  %192 = vmatpush1.bf16.msra.mxu0 %v182
  %193 = vmatprep.subr.bf16.mxu0 0
  %194 = vmatpush1.bf16.msra.mxu0 %v181
  %195 = vmatprep.subr.bf16.mxu0 0
  %196 = vmatpush1.bf16.msra.mxu0 %v180
  %197 = vmatprep.subr.bf16.mxu0 0
  %198 = vmatpush1.bf16.msra.mxu0 %v179
  %199 = vmatprep.subr.bf16.mxu0 0
  %200 = vmatpush1.bf16.msra.mxu0 %v178
  %201 = vmatprep.subr.bf16.mxu0 0
  %202 = vmatpush1.bf16.msra.mxu0 %v177
  %203 = vmatprep.subr.bf16.mxu0 0
  %204 = vmatpush1.bf16.msra.mxu0 %v176
  %205 = vmatprep.subr.bf16.mxu0 0
  %206 = vmatpush1.bf16.msra.mxu0 %v175
  %207 = vmatprep.subr.bf16.mxu0 0
  %208 = vmatpush2.bf16.msra.mxu0 0
  %209 = vmatprep.subr.bf16.mxu0 0
  %210 = vmatpush2.bf16.msra.mxu0 0
  %211 = vmatprep.subr.bf16.mxu0 0
  %212 = vmatpush2.bf16.msra.mxu0 0
  %213 = vmatprep.subr.bf16.mxu0 0
  %214 = vmatpush2.bf16.msra.mxu0 0
  %215 = vmatprep.subr.bf16.mxu0 0
  %216 = vmatpush2.bf16.msra.mxu0 0
  %217 = vmatprep.subr.bf16.mxu0 0
  %218 = vmatpush2.bf16.msra.mxu0 0
  %219 = vmatprep.subr.bf16.mxu0 0
  %220 = vmatpush2.bf16.msra.mxu0 0
  %221 = vmatprep.subr.bf16.mxu0 0
  %222 = vmatpush2.bf16.msra.mxu0 0
  %223 = vmatprep.mubr.bf16.mxu0 0
  %224 = vmatmul.mubr.bf16.gmra.mxu0 %v127
  %v225 = vpop.f32.mrf.mxu0
  %v226 = vadd.f32 0.0, %v225
  %v227 = vpop.f32.mrf.mxu0
  %v228 = vpop.f32.mrf.mxu0
  %v229 = vadd.f32 0.0, %v228
  %v230 = vpop.f32.mrf.mxu0
  %231 = vmatprep.mubr.bf16.mxu0 0
  %232 = vmatmul.mubr.bf16.gmra.mxu0 %v128
  %v233 = vpop.f32.mrf.mxu0
  %v234 = vadd.f32 0.0, %v233
  %v235 = vpop.f32.mrf.mxu0
  %v236 = vpop.f32.mrf.mxu0
  %v237 = vadd.f32 0.0, %v236
  %v238 = vpop.f32.mrf.mxu0
  %239 = vmatprep.mubr.bf16.mxu0 0
  %240 = vmatmul.mubr.bf16.gmra.mxu0 %v129
  %v241 = vpop.f32.mrf.mxu0
  %v242 = vadd.f32 0.0, %v241
  %v243 = vpop.f32.mrf.mxu0
  %v244 = vpop.f32.mrf.mxu0
  %v245 = vadd.f32 0.0, %v244
  %v246 = vpop.f32.mrf.mxu0
  %247 = vmatprep.mubr.bf16.mxu0 0
  %248 = vmatmul.mubr.bf16.gmra.mxu0 %v130
  %v249 = vpop.f32.mrf.mxu0
  %v250 = vadd.f32 0.0, %v249
  %v251 = vpop.f32.mrf.mxu0
  %v252 = vpop.f32.mrf.mxu0
  %v253 = vadd.f32 0.0, %v252
  %v254 = vpop.f32.mrf.mxu0
  %255 = vmatprep.mubr.bf16.mxu0 0
  %256 = vmatmul.mubr.bf16.gmra.mxu0 %v131
  %v257 = vpop.f32.mrf.mxu0
  %v258 = vadd.f32 0.0, %v257
  %v259 = vpop.f32.mrf.mxu0
  %v260 = vpop.f32.mrf.mxu0
  %v261 = vadd.f32 0.0, %v260
  %v262 = vpop.f32.mrf.mxu0
  %263 = vmatprep.mubr.bf16.mxu0 0
  %264 = vmatmul.mubr.bf16.gmra.mxu0 %v132
  %v265 = vpop.f32.mrf.mxu0
  %v266 = vadd.f32 0.0, %v265
  %v267 = vpop.f32.mrf.mxu0
  %v268 = vpop.f32.mrf.mxu0
  %v269 = vadd.f32 0.0, %v268
  %v270 = vpop.f32.mrf.mxu0
  %271 = vmatprep.mubr.bf16.mxu0 0
  %272 = vmatmul.mubr.bf16.gmra.mxu0 %v133
  %v273 = vpop.f32.mrf.mxu0
  %v274 = vadd.f32 0.0, %v273
  %v275 = vpop.f32.mrf.mxu0
  %v276 = vpop.f32.mrf.mxu0
  %v277 = vadd.f32 0.0, %v276
  %v278 = vpop.f32.mrf.mxu0
  %279 = vmatprep.mubr.bf16.mxu0 0
  %280 = vmatmul.mubr.bf16.gmra.mxu0 %v134
  %v281 = vpop.f32.mrf.mxu0
  %v282 = vadd.f32 0.0, %v281
  %v283 = vpop.f32.mrf.mxu0
  %v284 = vpop.f32.mrf.mxu0
  %v285 = vadd.f32 0.0, %v284
  %v286 = vpop.f32.mrf.mxu0
  %287 = vdwg.mxu0
  %v288 = vadd.f32 %v47, %v226
  %v289 = vadd.f32 %v48, %v229
  %v290 = vadd.f32 %v49, %v234
  %v291 = vadd.f32 %v50, %v237
  %v292 = vadd.f32 %v51, %v242
  %v293 = vadd.f32 %v52, %v245
  %v294 = vadd.f32 %v53, %v250
  %v295 = vadd.f32 %v54, %v253
  %v296 = vadd.f32 %v55, %v258
  %v297 = vadd.f32 %v56, %v261
  %v298 = vadd.f32 %v57, %v266
  %v299 = vadd.f32 %v58, %v269
  %v300 = vadd.f32 %v59, %v274
  %v301 = vadd.f32 %v60, %v277
  %v302 = vadd.f32 %v61, %v282
  %v303 = vadd.f32 %v62, %v285
  %304 = vst [vmem:[#allocation2] sm:$0xff] %v288
  %305 = vst [vmem:[#allocation2 + $0x8] sm:$0xff] %v289
  %306 = vst [vmem:[#allocation2 + $0x10] sm:$0xff] %v290
  %307 = vst [vmem:[#allocation2 + $0x18] sm:$0xff] %v291
  %308 = vst [vmem:[#allocation2 + $0x20] sm:$0xff] %v292
  %309 = vst [vmem:[#allocation2 + $0x28] sm:$0xff] %v293
  %310 = vst [vmem:[#allocation2 + $0x30] sm:$0xff] %v294
  %311 = vst [vmem:[#allocation2 + $0x38] sm:$0xff] %v295
  %312 = vst [vmem:[#allocation2 + $0x40] sm:$0xff] %v296
  %313 = vst [vmem:[#allocation2 + $0x48] sm:$0xff] %v297
  %314 = vst [vmem:[#allocation2 + $0x50] sm:$0xff] %v298
  %315 = vst [vmem:[#allocation2 + $0x58] sm:$0xff] %v299
  %316 = vst [vmem:[#allocation2 + $0x60] sm:$0xff] %v300
  %317 = vst [vmem:[#allocation2 + $0x68] sm:$0xff] %v301
  %318 = vst [vmem:[#allocation2 + $0x70] sm:$0xff] %v302
  %319 = vst [vmem:[#allocation2 + $0x78] sm:$0xff] %v303
  // Predicated region
  $region34: #{gcn_forward.5} parent=0 // pred_check
    %p320 = pneg %p27
  $region35: #{gcn_forward.5} parent=0 // pred_check_branch
    %322 = sbr.rel (%p320) target = $region37
  $region36: #{gcn_forward.5} parent=0 // pred_region
    %v323 = vld [vmem:[%s2] sm:$0xff]
    %v324 = vld [vmem:[%s2 + $0x8] sm:$0xff]
    %v325 = vld [vmem:[%s2 + $0x10] sm:$0xff]
    %v326 = vld [vmem:[%s2 + $0x18] sm:$0xff]
    %v327 = vld [vmem:[%s2 + $0x20] sm:$0xff]
    %v328 = vld [vmem:[%s2 + $0x28] sm:$0xff]
    %v329 = vld [vmem:[%s2 + $0x30] sm:$0xff]
    %v330 = vld [vmem:[%s2 + $0x38] sm:$0xff]
    %v331 = vld [vmem:[%s2 + $0x40] sm:$0xff]
    %v332 = vld [vmem:[%s2 + $0x48] sm:$0xff]
    %v333 = vld [vmem:[%s2 + $0x50] sm:$0xff]
    %v334 = vld [vmem:[%s2 + $0x58] sm:$0xff]
    %v335 = vld [vmem:[%s2 + $0x60] sm:$0xff]
    %v336 = vld [vmem:[%s2 + $0x68] sm:$0xff]
    %v337 = vld [vmem:[%s2 + $0x70] sm:$0xff]
    %v338 = vld [vmem:[%s2 + $0x78] sm:$0xff]
    %v339 = vld [vmem:[#allocation2] sm:$0xff]
    %v340 = vld [vmem:[#allocation2 + $0x8] sm:$0xff]
    %v341 = vld [vmem:[#allocation2 + $0x10] sm:$0xff]
    %v342 = vld [vmem:[#allocation2 + $0x18] sm:$0xff]
    %v343 = vld [vmem:[#allocation2 + $0x20] sm:$0xff]
    %v344 = vld [vmem:[#allocation2 + $0x28] sm:$0xff]
    %v345 = vld [vmem:[#allocation2 + $0x30] sm:$0xff]
    %v346 = vld [vmem:[#allocation2 + $0x38] sm:$0xff]
    %v347 = vld [vmem:[#allocation2 + $0x40] sm:$0xff]
    %v348 = vld [vmem:[#allocation2 + $0x48] sm:$0xff]
    %v349 = vld [vmem:[#allocation2 + $0x50] sm:$0xff]
    %v350 = vld [vmem:[#allocation2 + $0x58] sm:$0xff]
    %v351 = vld [vmem:[#allocation2 + $0x60] sm:$0xff]
    %v352 = vld [vmem:[#allocation2 + $0x68] sm:$0xff]
    %v353 = vld [vmem:[#allocation2 + $0x70] sm:$0xff]
    %v354 = vld [vmem:[#allocation2 + $0x78] sm:$0xff]
    %v355 = vadd.f32 %v323, %v339
    %v356 = vadd.f32 %v324, %v340
    %v357 = vadd.f32 %v325, %v341
    %v358 = vadd.f32 %v326, %v342
    %v359 = vadd.f32 %v327, %v343
    %v360 = vadd.f32 %v328, %v344
    %v361 = vadd.f32 %v329, %v345
    %v362 = vadd.f32 %v330, %v346
    %v363 = vadd.f32 %v331, %v347
    %v364 = vadd.f32 %v332, %v348
    %v365 = vadd.f32 %v333, %v349
    %v366 = vadd.f32 %v334, %v350
    %v367 = vadd.f32 %v335, %v351
    %v368 = vadd.f32 %v336, %v352
    %v369 = vadd.f32 %v337, %v353
    %v370 = vadd.f32 %v338, %v354
    %v371 = vld [vmem:[%s3] sm:$0xff]
    %v372 = vld [vmem:[%s3 + $0x8] sm:$0xff]
    %v373 = vld [vmem:[%s3 + $0x10] sm:$0xff]
    %v374 = vld [vmem:[%s3 + $0x18] sm:$0xff]
    %v375 = vld [vmem:[%s3 + $0x20] sm:$0xff]
    %v376 = vld [vmem:[%s3 + $0x28] sm:$0xff]
    %v377 = vld [vmem:[%s3 + $0x30] sm:$0xff]
    %v378 = vld [vmem:[%s3 + $0x38] sm:$0xff]
    %v379 = vld [vmem:[%s3 + $0x40] sm:$0xff]
    %v380 = vld [vmem:[%s3 + $0x48] sm:$0xff]
    %v381 = vld [vmem:[%s3 + $0x50] sm:$0xff]
    %v382 = vld [vmem:[%s3 + $0x58] sm:$0xff]
    %v383 = vld [vmem:[%s3 + $0x60] sm:$0xff]
    %v384 = vld [vmem:[%s3 + $0x68] sm:$0xff]
    %v385 = vld [vmem:[%s3 + $0x70] sm:$0xff]
    %v386 = vld [vmem:[%s3 + $0x78] sm:$0xff]
    %v387 = vld [vmem:[%s4] sm:$0x1]
    %389 = vset.pattern.permute.xlu0 0
    %390 = vperm.xlu0 %389, %v371
    %v391 = vpop.permute.xlu0 %390
    %394 = vset.pattern.permute.xlu0 0
    %395 = vperm.xlu0 %394, %v372
    %v396 = vpop.permute.xlu0 %395
    %399 = vset.pattern.permute.xlu0 0
    %400 = vperm.xlu0 %399, %v373
    %v401 = vpop.permute.xlu0 %400
    %404 = vset.pattern.permute.xlu0 0
    %405 = vperm.xlu0 %404, %v374
    %v406 = vpop.permute.xlu0 %405
    %409 = vset.pattern.permute.xlu0 0
    %410 = vperm.xlu0 %409, %v375
    %v411 = vpop.permute.xlu0 %410
    %414 = vset.pattern.permute.xlu0 0
    %415 = vperm.xlu0 %414, %v376
    %v416 = vpop.permute.xlu0 %415
    %419 = vset.pattern.permute.xlu0 0
    %420 = vperm.xlu0 %419, %v377
    %v421 = vpop.permute.xlu0 %420
    %424 = vset.pattern.permute.xlu0 0
    %425 = vperm.xlu0 %424, %v378
    %v426 = vpop.permute.xlu0 %425
    %429 = vset.pattern.permute.xlu0 0
    %430 = vperm.xlu0 %429, %v379
    %v431 = vpop.permute.xlu0 %430
    %434 = vset.pattern.permute.xlu0 0
    %435 = vperm.xlu0 %434, %v380
    %v436 = vpop.permute.xlu0 %435
    %439 = vset.pattern.permute.xlu0 0
    %440 = vperm.xlu0 %439, %v381
    %v441 = vpop.permute.xlu0 %440
    %444 = vset.pattern.permute.xlu0 0
    %445 = vperm.xlu0 %444, %v382
    %v446 = vpop.permute.xlu0 %445
    %449 = vset.pattern.permute.xlu0 0
    %450 = vperm.xlu0 %449, %v383
    %v451 = vpop.permute.xlu0 %450
    %454 = vset.pattern.permute.xlu0 0
    %455 = vperm.xlu0 %454, %v384
    %v456 = vpop.permute.xlu0 %455
    %459 = vset.pattern.permute.xlu0 0
    %460 = vperm.xlu0 %459, %v385
    %v461 = vpop.permute.xlu0 %460
    %464 = vset.pattern.permute.xlu0 0
    %465 = vperm.xlu0 %464, %v386
    %v466 = vpop.permute.xlu0 %465
    %v469 = vlaneseq
    %v470 = vshrl.u32 %v469, 7
    %v471 = vsub.s32 0, %v470
    %v472 = vrot.slane %v387, %v471
    %v474 = vmul.f32 %v391, %v472
    %v475 = vmul.f32 %v396, %v472
    %v476 = vmul.f32 %v401, %v472
    %v477 = vmul.f32 %v406, %v472
    %v478 = vmul.f32 %v411, %v472
    %v479 = vmul.f32 %v416, %v472
    %v480 = vmul.f32 %v421, %v472
    %v481 = vmul.f32 %v426, %v472
    %v482 = vmul.f32 %v431, %v472
    %v483 = vmul.f32 %v436, %v472
    %v484 = vmul.f32 %v441, %v472
    %v485 = vmul.f32 %v446, %v472
    %v486 = vmul.f32 %v451, %v472
    %v487 = vmul.f32 %v456, %v472
    %v488 = vmul.f32 %v461, %v472
    %v489 = vmul.f32 %v466, %v472
    %v490 = vadd.f32 %v355, %v474
    %v491 = vadd.f32 %v356, %v475
    %v492 = vadd.f32 %v357, %v476
    %v493 = vadd.f32 %v358, %v477
    %v494 = vadd.f32 %v359, %v478
    %v495 = vadd.f32 %v360, %v479
    %v496 = vadd.f32 %v361, %v480
    %v497 = vadd.f32 %v362, %v481
    %v498 = vadd.f32 %v363, %v482
    %v499 = vadd.f32 %v364, %v483
    %v500 = vadd.f32 %v365, %v484
    %v501 = vadd.f32 %v366, %v485
    %v502 = vadd.f32 %v367, %v486
    %v503 = vadd.f32 %v368, %v487
    %v504 = vadd.f32 %v369, %v488
    %v505 = vadd.f32 %v370, %v489
    %v506 = vmax.f32 %v490, 0.0
    %v507 = vmax.f32 %v491, 0.0
    %v508 = vmax.f32 %v492, 0.0
    %v509 = vmax.f32 %v493, 0.0
    %v510 = vmax.f32 %v494, 0.0
    %v511 = vmax.f32 %v495, 0.0
    %v512 = vmax.f32 %v496, 0.0
    %v513 = vmax.f32 %v497, 0.0
    %v514 = vmax.f32 %v498, 0.0
    %v515 = vmax.f32 %v499, 0.0
    %v516 = vmax.f32 %v500, 0.0
    %v517 = vmax.f32 %v501, 0.0
    %v518 = vmax.f32 %v502, 0.0
    %v519 = vmax.f32 %v503, 0.0
    %v520 = vmax.f32 %v504, 0.0
    %v521 = vmax.f32 %v505, 0.0
    %v522 = vpack.c.bf16 %v507, %v506
    %v523 = vpack.c.bf16 %v509, %v508
    %v524 = vpack.c.bf16 %v511, %v510
    %v525 = vpack.c.bf16 %v513, %v512
    %v526 = vpack.c.bf16 %v515, %v514
    %v527 = vpack.c.bf16 %v517, %v516
    %v528 = vpack.c.bf16 %v519, %v518
    %v529 = vpack.c.bf16 %v521, %v520
    %v530 = vld [vmem:[%s5] sm:$0xf]
    %v531 = vld [vmem:[%s5 + $0x4] sm:$0xf]
    %v532 = vld [vmem:[%s5 + $0x8] sm:$0xf]
    %v533 = vld [vmem:[%s5 + $0xc] sm:$0xf]
    %v534 = vld [vmem:[%s5 + $0x10] sm:$0xf]
    %v535 = vld [vmem:[%s5 + $0x14] sm:$0xf]
    %v536 = vld [vmem:[%s5 + $0x18] sm:$0xf]
    %v537 = vld [vmem:[%s5 + $0x1c] sm:$0xf]
    %v538 = vld [vmem:[%s5 + $0x20] sm:$0xf]
    %v539 = vld [vmem:[%s5 + $0x24] sm:$0xf]
    %v540 = vld [vmem:[%s5 + $0x28] sm:$0xf]
    %v541 = vld [vmem:[%s5 + $0x2c] sm:$0xf]
    %v542 = vld [vmem:[%s5 + $0x30] sm:$0xf]
    %v543 = vld [vmem:[%s5 + $0x34] sm:$0xf]
    %v544 = vld [vmem:[%s5 + $0x38] sm:$0xf]
    %v545 = vld [vmem:[%s5 + $0x3c] sm:$0xf]
    %v546 = vld [vmem:[%s6] sm:$0x1]
    %v548 = vlaneseq
    %v549 = vshrl.u32 %v548, 7
    %v550 = vsub.s32 0, %v549
    %v551 = vrot.slane %v546, %v550
    %v569 = vunpack.c.l.b16 %v530
    %v570 = vunpack.c.l.b16 %v531
    %v571 = vunpack.c.l.b16 %v532
    %v572 = vunpack.c.l.b16 %v533
    %v573 = vunpack.c.l.b16 %v534
    %v574 = vunpack.c.l.b16 %v535
    %v575 = vunpack.c.l.b16 %v536
    %v576 = vunpack.c.l.b16 %v537
    %v577 = vunpack.c.l.b16 %v538
    %v578 = vunpack.c.l.b16 %v539
    %v579 = vunpack.c.l.b16 %v540
    %v580 = vunpack.c.l.b16 %v541
    %v581 = vunpack.c.l.b16 %v542
    %v582 = vunpack.c.l.b16 %v543
    %v583 = vunpack.c.l.b16 %v544
    %v584 = vunpack.c.l.b16 %v545
    %v585 = vpack.c.b16 %v570, %v569
    %v586 = vpack.c.b16 %v572, %v571
    %v587 = vpack.c.b16 %v574, %v573
    %v588 = vpack.c.b16 %v576, %v575
    %v589 = vpack.c.b16 %v578, %v577
    %v590 = vpack.c.b16 %v580, %v579
    %v591 = vpack.c.b16 %v582, %v581
    %v592 = vpack.c.b16 %v584, %v583
    %601 = vmatprep.subr.bf16.mxu0 0
    %602 = vmatpush1.bf16.msra.mxu0 %v592
    %603 = vmatprep.subr.bf16.mxu0 0
    %604 = vmatpush1.bf16.msra.mxu0 %v591
    %605 = vmatprep.subr.bf16.mxu0 0
    %606 = vmatpush1.bf16.msra.mxu0 %v590
    %607 = vmatprep.subr.bf16.mxu0 0
    %608 = vmatpush1.bf16.msra.mxu0 %v589
    %609 = vmatprep.subr.bf16.mxu0 0
    %610 = vmatpush1.bf16.msra.mxu0 %v588
    %611 = vmatprep.subr.bf16.mxu0 0
    %612 = vmatpush1.bf16.msra.mxu0 %v587
    %613 = vmatprep.subr.bf16.mxu0 0
    %614 = vmatpush1.bf16.msra.mxu0 %v586
    %615 = vmatprep.subr.bf16.mxu0 0
    %616 = vmatpush1.bf16.msra.mxu0 %v585
    %617 = vmatprep.subr.bf16.mxu0 0
    %618 = vmatpush2.bf16.msra.mxu0 0
    %619 = vmatprep.subr.bf16.mxu0 0
    %620 = vmatpush2.bf16.msra.mxu0 0
    %621 = vmatprep.subr.bf16.mxu0 0
    %622 = vmatpush2.bf16.msra.mxu0 0
    %623 = vmatprep.subr.bf16.mxu0 0
    %624 = vmatpush2.bf16.msra.mxu0 0
    %625 = vmatprep.subr.bf16.mxu0 0
    %626 = vmatpush2.bf16.msra.mxu0 0
    %627 = vmatprep.subr.bf16.mxu0 0
    %628 = vmatpush2.bf16.msra.mxu0 0
    %629 = vmatprep.subr.bf16.mxu0 0
    %630 = vmatpush2.bf16.msra.mxu0 0
    %631 = vmatprep.subr.bf16.mxu0 0
    %632 = vmatpush2.bf16.msra.mxu0 0
    %633 = vmatprep.mubr.bf16.mxu0 0
    %634 = vmatmul.mubr.bf16.gmra.mxu0 %v522
    %v635 = vpop.f32.mrf.mxu0
    %v636 = vadd.f32 %v551, %v635
    %v637 = vpop.f32.mrf.mxu0
    %v638 = vpop.f32.mrf.mxu0
    %v639 = vadd.f32 %v551, %v638
    %v640 = vpop.f32.mrf.mxu0
    %641 = vmatprep.mubr.bf16.mxu0 0
    %642 = vmatmul.mubr.bf16.gmra.mxu0 %v523
    %v643 = vpop.f32.mrf.mxu0
    %v644 = vadd.f32 %v551, %v643
    %v645 = vpop.f32.mrf.mxu0
    %v646 = vpop.f32.mrf.mxu0
    %v647 = vadd.f32 %v551, %v646
    %v648 = vpop.f32.mrf.mxu0
    %649 = vmatprep.mubr.bf16.mxu0 0
    %650 = vmatmul.mubr.bf16.gmra.mxu0 %v524
    %v651 = vpop.f32.mrf.mxu0
    %v652 = vadd.f32 %v551, %v651
    %v653 = vpop.f32.mrf.mxu0
    %v654 = vpop.f32.mrf.mxu0
    %v655 = vadd.f32 %v551, %v654
    %v656 = vpop.f32.mrf.mxu0
    %657 = vmatprep.mubr.bf16.mxu0 0
    %658 = vmatmul.mubr.bf16.gmra.mxu0 %v525
    %v659 = vpop.f32.mrf.mxu0
    %v660 = vadd.f32 %v551, %v659
    %v661 = vpop.f32.mrf.mxu0
    %v662 = vpop.f32.mrf.mxu0
    %v663 = vadd.f32 %v551, %v662
    %v664 = vpop.f32.mrf.mxu0
    %665 = vmatprep.mubr.bf16.mxu0 0
    %666 = vmatmul.mubr.bf16.gmra.mxu0 %v526
    %v667 = vpop.f32.mrf.mxu0
    %v668 = vadd.f32 %v551, %v667
    %v669 = vpop.f32.mrf.mxu0
    %v670 = vpop.f32.mrf.mxu0
    %v671 = vadd.f32 %v551, %v670
    %v672 = vpop.f32.mrf.mxu0
    %673 = vmatprep.mubr.bf16.mxu0 0
    %674 = vmatmul.mubr.bf16.gmra.mxu0 %v527
    %v675 = vpop.f32.mrf.mxu0
    %v676 = vadd.f32 %v551, %v675
    %v677 = vpop.f32.mrf.mxu0
    %v678 = vpop.f32.mrf.mxu0
    %v679 = vadd.f32 %v551, %v678
    %v680 = vpop.f32.mrf.mxu0
    %681 = vmatprep.mubr.bf16.mxu0 0
    %682 = vmatmul.mubr.bf16.gmra.mxu0 %v528
    %v683 = vpop.f32.mrf.mxu0
    %v684 = vadd.f32 %v551, %v683
    %v685 = vpop.f32.mrf.mxu0
    %v686 = vpop.f32.mrf.mxu0
    %v687 = vadd.f32 %v551, %v686
    %v688 = vpop.f32.mrf.mxu0
    %689 = vmatprep.mubr.bf16.mxu0 0
    %690 = vmatmul.mubr.bf16.gmra.mxu0 %v529
    %v691 = vpop.f32.mrf.mxu0
    %v692 = vadd.f32 %v551, %v691
    %v693 = vpop.f32.mrf.mxu0
    %v694 = vpop.f32.mrf.mxu0
    %v695 = vadd.f32 %v551, %v694
    %v696 = vpop.f32.mrf.mxu0
    %697 = vdwg.mxu0
    %698 = vst [vmem:[%s7] sm:$0xff] %v636
    %699 = vst [vmem:[%s7 + $0x8] sm:$0xff] %v639
    %700 = vst [vmem:[%s7 + $0x10] sm:$0xff] %v644
    %701 = vst [vmem:[%s7 + $0x18] sm:$0xff] %v647
    %702 = vst [vmem:[%s7 + $0x20] sm:$0xff] %v652
    %703 = vst [vmem:[%s7 + $0x28] sm:$0xff] %v655
    %704 = vst [vmem:[%s7 + $0x30] sm:$0xff] %v660
    %705 = vst [vmem:[%s7 + $0x38] sm:$0xff] %v663
    %706 = vst [vmem:[%s7 + $0x40] sm:$0xff] %v668
    %707 = vst [vmem:[%s7 + $0x48] sm:$0xff] %v671
    %708 = vst [vmem:[%s7 + $0x50] sm:$0xff] %v676
    %709 = vst [vmem:[%s7 + $0x58] sm:$0xff] %v679
    %710 = vst [vmem:[%s7 + $0x60] sm:$0xff] %v684
    %711 = vst [vmem:[%s7 + $0x68] sm:$0xff] %v687
    %712 = vst [vmem:[%s7 + $0x70] sm:$0xff] %v692
    %713 = vst [vmem:[%s7 + $0x78] sm:$0xff] %v695
  $region37: #{gcn_forward.5} parent=0 // pred_fallthru
    _
  // Predicated region
  $region38: #{gcn_forward.5} parent=0 // pred_check
    _
  $region39: #{gcn_forward.5} parent=0 // pred_check_branch
    %715 = sbr.rel (0) target = $region41
  $region40: #{gcn_forward.5} parent=0 // pred_region
    _
  $region41: #{gcn_forward.5} parent=0 // pred_fallthru
    _
  // Predicated region
  $region42: #{gcn_forward.5} parent=0 // pred_check
    _
  $region43: #{gcn_forward.5} parent=0 // pred_check_branch
    %717 = sbr.rel (0) target = $region45
  $region44: #{gcn_forward.5} parent=0 // pred_region
    _
  $region45: #{gcn_forward.5} parent=0 // pred_fallthru
    _

// kernel: gcn_forward.4
$region0: #{gcn_forward.4}
  #allocation0 [shape = 'u32[]', space=smem, size = 0x4, offset = 0x4, fixed_abs, tag = 'smem constant byte address 0x4 - core index']
  #allocation1 [shape = 'u32[144,128]{1,0:T(1,128)}', space=vmem, size = 0x12000, scoped, tag = 'internal scratch']
  #allocation2 [shape = 'f32[128,128]{1,0:T(8,128)}', space=vmem, size = 0x10000, scoped, tag = 'scratch operand']
  %s0 = inlined_call_operand.vmem [shape: bf16[128,128], index: 0, kind: input, shape index: {}]
  %s1 = inlined_call_operand.vmem [shape: bf16[128,128], index: 1, kind: input, shape index: {}]
  %s2 = inlined_call_operand.vmem [shape: f32[128,128], index: 2, kind: input, shape index: {}]
  %s3 = inlined_call_operand.vmem [shape: f32[128,1], index: 3, kind: input, shape index: {}]
  %s4 = inlined_call_operand.vmem [shape: f32[1,128], index: 4, kind: input, shape index: {}]
  %s5 = inlined_call_operand.vmem [shape: bf16[128,256], index: 5, kind: input, shape index: {}]
  %s6 = inlined_call_operand.vmem [shape: f32[128,128], index: 6, kind: output, shape index: {0}]
  %s7 = inlined_call_operand.vmem [shape: bf16[128,128], index: 7, kind: output, shape index: {1}]
  %8 = xla_tuple %s6, %s7
  %s9 = sld [smem:[#allocation0]]
  $region50: #{gcn_forward.4} parent=0
    _
  %s11 = ssub.s32 1, %s9
  %s12 = scalar_select 0, %s11, %s9
  // Predicated region
  $region2: #{gcn_forward.4} parent=0 // pred_check
    _
  $region3: #{gcn_forward.4} parent=0 // pred_check_branch
    %14 = sbr.rel (0) target = $region5
  $region4: #{gcn_forward.4} parent=0 // pred_region
    _
  $region5: #{gcn_forward.4} parent=0 // pred_fallthru
    _
  // Predicated region
  $region6: #{gcn_forward.4} parent=0 // pred_check
    _
  $region7: #{gcn_forward.4} parent=0 // pred_check_branch
    %16 = sbr.rel (0) target = $region9
  $region8: #{gcn_forward.4} parent=0 // pred_region
    _
  $region9: #{gcn_forward.4} parent=0 // pred_fallthru
    _
  // Predicated region
  $region10: #{gcn_forward.4} parent=0 // pred_check
    _
  $region11: #{gcn_forward.4} parent=0 // pred_check_branch
    %18 = sbr.rel (0) target = $region13
  $region12: #{gcn_forward.4} parent=0 // pred_region
    _
  $region13: #{gcn_forward.4} parent=0 // pred_fallthru
    _
  // Predicated region
  $region14: #{gcn_forward.4} parent=0 // pred_check
    _
  $region15: #{gcn_forward.4} parent=0 // pred_check_branch
    %20 = sbr.rel (0) target = $region17
  $region16: #{gcn_forward.4} parent=0 // pred_region
    _
  $region17: #{gcn_forward.4} parent=0 // pred_fallthru
    _
  // Predicated region
  $region18: #{gcn_forward.4} parent=0 // pred_check
    _
  $region19: #{gcn_forward.4} parent=0 // pred_check_branch
    %22 = sbr.rel (0) target = $region21
  $region20: #{gcn_forward.4} parent=0 // pred_region
    _
  $region21: #{gcn_forward.4} parent=0 // pred_fallthru
    _
  // Predicated region
  $region22: #{gcn_forward.4} parent=0 // pred_check
    _
  $region23: #{gcn_forward.4} parent=0 // pred_check_branch
    %24 = sbr.rel (0) target = $region25
  $region24: #{gcn_forward.4} parent=0 // pred_region
    _
  $region25: #{gcn_forward.4} parent=0 // pred_fallthru
    _
  %p26 = scmp.eq.s32.totalorder 0, 0
  // Predicated region
  $region26: #{gcn_forward.4} parent=0 // pred_check
    %p27 = pneg %p26
  $region27: #{gcn_forward.4} parent=0 // pred_check_branch
    %29 = sbr.rel (%p27) target = $region29
  $region28: #{gcn_forward.4} parent=0 // pred_region
    %30 = vst [vmem:[#allocation2] sm:$0xff] 0.0
    %31 = vst [vmem:[#allocation2 + $0x8] sm:$0xff] 0.0
    %32 = vst [vmem:[#allocation2 + $0x10] sm:$0xff] 0.0
    %33 = vst [vmem:[#allocation2 + $0x18] sm:$0xff] 0.0
    %34 = vst [vmem:[#allocation2 + $0x20] sm:$0xff] 0.0
    %35 = vst [vmem:[#allocation2 + $0x28] sm:$0xff] 0.0
    %36 = vst [vmem:[#allocation2 + $0x30] sm:$0xff] 0.0
    %37 = vst [vmem:[#allocation2 + $0x38] sm:$0xff] 0.0
    %38 = vst [vmem:[#allocation2 + $0x40] sm:$0xff] 0.0
    %39 = vst [vmem:[#allocation2 + $0x48] sm:$0xff] 0.0
    %40 = vst [vmem:[#allocation2 + $0x50] sm:$0xff] 0.0
    %41 = vst [vmem:[#allocation2 + $0x58] sm:$0xff] 0.0
    %42 = vst [vmem:[#allocation2 + $0x60] sm:$0xff] 0.0
    %43 = vst [vmem:[#allocation2 + $0x68] sm:$0xff] 0.0
    %44 = vst [vmem:[#allocation2 + $0x70] sm:$0xff] 0.0
    %45 = vst [vmem:[#allocation2 + $0x78] sm:$0xff] 0.0
  $region29: #{gcn_forward.4} parent=0 // pred_fallthru
    _
  %v46 = vld [vmem:[#allocation2] sm:$0xff]
  %v47 = vld [vmem:[#allocation2 + $0x8] sm:$0xff]
  %v48 = vld [vmem:[#allocation2 + $0x10] sm:$0xff]
  %v49 = vld [vmem:[#allocation2 + $0x18] sm:$0xff]
  %v50 = vld [vmem:[#allocation2 + $0x20] sm:$0xff]
  %v51 = vld [vmem:[#allocation2 + $0x28] sm:$0xff]
  %v52 = vld [vmem:[#allocation2 + $0x30] sm:$0xff]
  %v53 = vld [vmem:[#allocation2 + $0x38] sm:$0xff]
  %v54 = vld [vmem:[#allocation2 + $0x40] sm:$0xff]
  %v55 = vld [vmem:[#allocation2 + $0x48] sm:$0xff]
  %v56 = vld [vmem:[#allocation2 + $0x50] sm:$0xff]
  %v57 = vld [vmem:[#allocation2 + $0x58] sm:$0xff]
  %v58 = vld [vmem:[#allocation2 + $0x60] sm:$0xff]
  %v59 = vld [vmem:[#allocation2 + $0x68] sm:$0xff]
  %v60 = vld [vmem:[#allocation2 + $0x70] sm:$0xff]
  %v61 = vld [vmem:[#allocation2 + $0x78] sm:$0xff]
  %v62 = vld [vmem:[%s0] sm:$0xf]
  %v63 = vld [vmem:[%s0 + $0x4] sm:$0xf]
  %v64 = vld [vmem:[%s0 + $0x8] sm:$0xf]
  %v65 = vld [vmem:[%s0 + $0xc] sm:$0xf]
  %v66 = vld [vmem:[%s0 + $0x10] sm:$0xf]
  %v67 = vld [vmem:[%s0 + $0x14] sm:$0xf]
  %v68 = vld [vmem:[%s0 + $0x18] sm:$0xf]
  %v69 = vld [vmem:[%s0 + $0x1c] sm:$0xf]
  %v70 = vld [vmem:[%s0 + $0x20] sm:$0xf]
  %v71 = vld [vmem:[%s0 + $0x24] sm:$0xf]
  %v72 = vld [vmem:[%s0 + $0x28] sm:$0xf]
  %v73 = vld [vmem:[%s0 + $0x2c] sm:$0xf]
  %v74 = vld [vmem:[%s0 + $0x30] sm:$0xf]
  %v75 = vld [vmem:[%s0 + $0x34] sm:$0xf]
  %v76 = vld [vmem:[%s0 + $0x38] sm:$0xf]
  %v77 = vld [vmem:[%s0 + $0x3c] sm:$0xf]
  %v78 = vld [vmem:[%s1] sm:$0xf]
  %v79 = vld [vmem:[%s1 + $0x4] sm:$0xf]
  %v80 = vld [vmem:[%s1 + $0x8] sm:$0xf]
  %v81 = vld [vmem:[%s1 + $0xc] sm:$0xf]
  %v82 = vld [vmem:[%s1 + $0x10] sm:$0xf]
  %v83 = vld [vmem:[%s1 + $0x14] sm:$0xf]
  %v84 = vld [vmem:[%s1 + $0x18] sm:$0xf]
  %v85 = vld [vmem:[%s1 + $0x1c] sm:$0xf]
  %v86 = vld [vmem:[%s1 + $0x20] sm:$0xf]
  %v87 = vld [vmem:[%s1 + $0x24] sm:$0xf]
  %v88 = vld [vmem:[%s1 + $0x28] sm:$0xf]
  %v89 = vld [vmem:[%s1 + $0x2c] sm:$0xf]
  %v90 = vld [vmem:[%s1 + $0x30] sm:$0xf]
  %v91 = vld [vmem:[%s1 + $0x34] sm:$0xf]
  %v92 = vld [vmem:[%s1 + $0x38] sm:$0xf]
  %v93 = vld [vmem:[%s1 + $0x3c] sm:$0xf]
  %v110 = vunpack.c.l.b16 %v62
  %v111 = vunpack.c.l.b16 %v63
  %v112 = vunpack.c.l.b16 %v64
  %v113 = vunpack.c.l.b16 %v65
  %v114 = vunpack.c.l.b16 %v66
  %v115 = vunpack.c.l.b16 %v67
  %v116 = vunpack.c.l.b16 %v68
  %v117 = vunpack.c.l.b16 %v69
  %v118 = vunpack.c.l.b16 %v70
  %v119 = vunpack.c.l.b16 %v71
  %v120 = vunpack.c.l.b16 %v72
  %v121 = vunpack.c.l.b16 %v73
  %v122 = vunpack.c.l.b16 %v74
  %v123 = vunpack.c.l.b16 %v75
  %v124 = vunpack.c.l.b16 %v76
  %v125 = vunpack.c.l.b16 %v77
  %v126 = vpack.c.b16 %v111, %v110
  %v127 = vpack.c.b16 %v113, %v112
  %v128 = vpack.c.b16 %v115, %v114
  %v129 = vpack.c.b16 %v117, %v116
  %v130 = vpack.c.b16 %v119, %v118
  %v131 = vpack.c.b16 %v121, %v120
  %v132 = vpack.c.b16 %v123, %v122
  %v133 = vpack.c.b16 %v125, %v124
  %v158 = vunpack.c.l.b16 %v78
  %v159 = vunpack.c.l.b16 %v79
  %v160 = vunpack.c.l.b16 %v80
  %v161 = vunpack.c.l.b16 %v81
  %v162 = vunpack.c.l.b16 %v82
  %v163 = vunpack.c.l.b16 %v83
  %v164 = vunpack.c.l.b16 %v84
  %v165 = vunpack.c.l.b16 %v85
  %v166 = vunpack.c.l.b16 %v86
  %v167 = vunpack.c.l.b16 %v87
  %v168 = vunpack.c.l.b16 %v88
  %v169 = vunpack.c.l.b16 %v89
  %v170 = vunpack.c.l.b16 %v90
  %v171 = vunpack.c.l.b16 %v91
  %v172 = vunpack.c.l.b16 %v92
  %v173 = vunpack.c.l.b16 %v93
  %v174 = vpack.c.b16 %v159, %v158
  %v175 = vpack.c.b16 %v161, %v160
  %v176 = vpack.c.b16 %v163, %v162
  %v177 = vpack.c.b16 %v165, %v164
  %v178 = vpack.c.b16 %v167, %v166
  %v179 = vpack.c.b16 %v169, %v168
  %v180 = vpack.c.b16 %v171, %v170
  %v181 = vpack.c.b16 %v173, %v172
  %190 = vmatprep.subr.bf16.mxu0 0
  %191 = vmatpush1.bf16.msra.mxu0 %v181
  %192 = vmatprep.subr.bf16.mxu0 0
  %193 = vmatpush1.bf16.msra.mxu0 %v180
  %194 = vmatprep.subr.bf16.mxu0 0
  %195 = vmatpush1.bf16.msra.mxu0 %v179
  %196 = vmatprep.subr.bf16.mxu0 0
  %197 = vmatpush1.bf16.msra.mxu0 %v178
  %198 = vmatprep.subr.bf16.mxu0 0
  %199 = vmatpush1.bf16.msra.mxu0 %v177
  %200 = vmatprep.subr.bf16.mxu0 0
  %201 = vmatpush1.bf16.msra.mxu0 %v176
  %202 = vmatprep.subr.bf16.mxu0 0
  %203 = vmatpush1.bf16.msra.mxu0 %v175
  %204 = vmatprep.subr.bf16.mxu0 0
  %205 = vmatpush1.bf16.msra.mxu0 %v174
  %206 = vmatprep.subr.bf16.mxu0 0
  %207 = vmatpush2.bf16.msra.mxu0 0
  %208 = vmatprep.subr.bf16.mxu0 0
  %209 = vmatpush2.bf16.msra.mxu0 0
  %210 = vmatprep.subr.bf16.mxu0 0
  %211 = vmatpush2.bf16.msra.mxu0 0
  %212 = vmatprep.subr.bf16.mxu0 0
  %213 = vmatpush2.bf16.msra.mxu0 0
  %214 = vmatprep.subr.bf16.mxu0 0
  %215 = vmatpush2.bf16.msra.mxu0 0
  %216 = vmatprep.subr.bf16.mxu0 0
  %217 = vmatpush2.bf16.msra.mxu0 0
  %218 = vmatprep.subr.bf16.mxu0 0
  %219 = vmatpush2.bf16.msra.mxu0 0
  %220 = vmatprep.subr.bf16.mxu0 0
  %221 = vmatpush2.bf16.msra.mxu0 0
  %222 = vmatprep.mubr.bf16.mxu0 0
  %223 = vmatmul.mubr.bf16.gmra.mxu0 %v126
  %v224 = vpop.f32.mrf.mxu0
  %v225 = vadd.f32 0.0, %v224
  %v226 = vpop.f32.mrf.mxu0
  %v227 = vpop.f32.mrf.mxu0
  %v228 = vadd.f32 0.0, %v227
  %v229 = vpop.f32.mrf.mxu0
  %230 = vmatprep.mubr.bf16.mxu0 0
  %231 = vmatmul.mubr.bf16.gmra.mxu0 %v127
  %v232 = vpop.f32.mrf.mxu0
  %v233 = vadd.f32 0.0, %v232
  %v234 = vpop.f32.mrf.mxu0
  %v235 = vpop.f32.mrf.mxu0
  %v236 = vadd.f32 0.0, %v235
  %v237 = vpop.f32.mrf.mxu0
  %238 = vmatprep.mubr.bf16.mxu0 0
  %239 = vmatmul.mubr.bf16.gmra.mxu0 %v128
  %v240 = vpop.f32.mrf.mxu0
  %v241 = vadd.f32 0.0, %v240
  %v242 = vpop.f32.mrf.mxu0
  %v243 = vpop.f32.mrf.mxu0
  %v244 = vadd.f32 0.0, %v243
  %v245 = vpop.f32.mrf.mxu0
  %246 = vmatprep.mubr.bf16.mxu0 0
  %247 = vmatmul.mubr.bf16.gmra.mxu0 %v129
  %v248 = vpop.f32.mrf.mxu0
  %v249 = vadd.f32 0.0, %v248
  %v250 = vpop.f32.mrf.mxu0
  %v251 = vpop.f32.mrf.mxu0
  %v252 = vadd.f32 0.0, %v251
  %v253 = vpop.f32.mrf.mxu0
  %254 = vmatprep.mubr.bf16.mxu0 0
  %255 = vmatmul.mubr.bf16.gmra.mxu0 %v130
  %v256 = vpop.f32.mrf.mxu0
  %v257 = vadd.f32 0.0, %v256
  %v258 = vpop.f32.mrf.mxu0
  %v259 = vpop.f32.mrf.mxu0
  %v260 = vadd.f32 0.0, %v259
  %v261 = vpop.f32.mrf.mxu0
  %262 = vmatprep.mubr.bf16.mxu0 0
  %263 = vmatmul.mubr.bf16.gmra.mxu0 %v131
  %v264 = vpop.f32.mrf.mxu0
  %v265 = vadd.f32 0.0, %v264
  %v266 = vpop.f32.mrf.mxu0
  %v267 = vpop.f32.mrf.mxu0
  %v268 = vadd.f32 0.0, %v267
  %v269 = vpop.f32.mrf.mxu0
  %270 = vmatprep.mubr.bf16.mxu0 0
  %271 = vmatmul.mubr.bf16.gmra.mxu0 %v132
  %v272 = vpop.f32.mrf.mxu0
  %v273 = vadd.f32 0.0, %v272
  %v274 = vpop.f32.mrf.mxu0
  %v275 = vpop.f32.mrf.mxu0
  %v276 = vadd.f32 0.0, %v275
  %v277 = vpop.f32.mrf.mxu0
  %278 = vmatprep.mubr.bf16.mxu0 0
  %279 = vmatmul.mubr.bf16.gmra.mxu0 %v133
  %v280 = vpop.f32.mrf.mxu0
  %v281 = vadd.f32 0.0, %v280
  %v282 = vpop.f32.mrf.mxu0
  %v283 = vpop.f32.mrf.mxu0
  %v284 = vadd.f32 0.0, %v283
  %v285 = vpop.f32.mrf.mxu0
  %286 = vdwg.mxu0
  %v287 = vadd.f32 %v46, %v225
  %v288 = vadd.f32 %v47, %v228
  %v289 = vadd.f32 %v48, %v233
  %v290 = vadd.f32 %v49, %v236
  %v291 = vadd.f32 %v50, %v241
  %v292 = vadd.f32 %v51, %v244
  %v293 = vadd.f32 %v52, %v249
  %v294 = vadd.f32 %v53, %v252
  %v295 = vadd.f32 %v54, %v257
  %v296 = vadd.f32 %v55, %v260
  %v297 = vadd.f32 %v56, %v265
  %v298 = vadd.f32 %v57, %v268
  %v299 = vadd.f32 %v58, %v273
  %v300 = vadd.f32 %v59, %v276
  %v301 = vadd.f32 %v60, %v281
  %v302 = vadd.f32 %v61, %v284
  %303 = vst [vmem:[#allocation2] sm:$0xff] %v287
  %304 = vst [vmem:[#allocation2 + $0x8] sm:$0xff] %v288
  %305 = vst [vmem:[#allocation2 + $0x10] sm:$0xff] %v289
  %306 = vst [vmem:[#allocation2 + $0x18] sm:$0xff] %v290
  %307 = vst [vmem:[#allocation2 + $0x20] sm:$0xff] %v291
  %308 = vst [vmem:[#allocation2 + $0x28] sm:$0xff] %v292
  %309 = vst [vmem:[#allocation2 + $0x30] sm:$0xff] %v293
  %310 = vst [vmem:[#allocation2 + $0x38] sm:$0xff] %v294
  %311 = vst [vmem:[#allocation2 + $0x40] sm:$0xff] %v295
  %312 = vst [vmem:[#allocation2 + $0x48] sm:$0xff] %v296
  %313 = vst [vmem:[#allocation2 + $0x50] sm:$0xff] %v297
  %314 = vst [vmem:[#allocation2 + $0x58] sm:$0xff] %v298
  %315 = vst [vmem:[#allocation2 + $0x60] sm:$0xff] %v299
  %316 = vst [vmem:[#allocation2 + $0x68] sm:$0xff] %v300
  %317 = vst [vmem:[#allocation2 + $0x70] sm:$0xff] %v301
  %318 = vst [vmem:[#allocation2 + $0x78] sm:$0xff] %v302
  // Predicated region
  $region30: #{gcn_forward.4} parent=0 // pred_check
    %p319 = pneg %p26
  $region31: #{gcn_forward.4} parent=0 // pred_check_branch
    %321 = sbr.rel (%p319) target = $region33
  $region32: #{gcn_forward.4} parent=0 // pred_region
    %v322 = vld [vmem:[%s2] sm:$0xff]
    %v323 = vld [vmem:[%s2 + $0x8] sm:$0xff]
    %v324 = vld [vmem:[%s2 + $0x10] sm:$0xff]
    %v325 = vld [vmem:[%s2 + $0x18] sm:$0xff]
    %v326 = vld [vmem:[%s2 + $0x20] sm:$0xff]
    %v327 = vld [vmem:[%s2 + $0x28] sm:$0xff]
    %v328 = vld [vmem:[%s2 + $0x30] sm:$0xff]
    %v329 = vld [vmem:[%s2 + $0x38] sm:$0xff]
    %v330 = vld [vmem:[%s2 + $0x40] sm:$0xff]
    %v331 = vld [vmem:[%s2 + $0x48] sm:$0xff]
    %v332 = vld [vmem:[%s2 + $0x50] sm:$0xff]
    %v333 = vld [vmem:[%s2 + $0x58] sm:$0xff]
    %v334 = vld [vmem:[%s2 + $0x60] sm:$0xff]
    %v335 = vld [vmem:[%s2 + $0x68] sm:$0xff]
    %v336 = vld [vmem:[%s2 + $0x70] sm:$0xff]
    %v337 = vld [vmem:[%s2 + $0x78] sm:$0xff]
    %v338 = vld [vmem:[#allocation2] sm:$0xff]
    %v339 = vld [vmem:[#allocation2 + $0x8] sm:$0xff]
    %v340 = vld [vmem:[#allocation2 + $0x10] sm:$0xff]
    %v341 = vld [vmem:[#allocation2 + $0x18] sm:$0xff]
    %v342 = vld [vmem:[#allocation2 + $0x20] sm:$0xff]
    %v343 = vld [vmem:[#allocation2 + $0x28] sm:$0xff]
    %v344 = vld [vmem:[#allocation2 + $0x30] sm:$0xff]
    %v345 = vld [vmem:[#allocation2 + $0x38] sm:$0xff]
    %v346 = vld [vmem:[#allocation2 + $0x40] sm:$0xff]
    %v347 = vld [vmem:[#allocation2 + $0x48] sm:$0xff]
    %v348 = vld [vmem:[#allocation2 + $0x50] sm:$0xff]
    %v349 = vld [vmem:[#allocation2 + $0x58] sm:$0xff]
    %v350 = vld [vmem:[#allocation2 + $0x60] sm:$0xff]
    %v351 = vld [vmem:[#allocation2 + $0x68] sm:$0xff]
    %v352 = vld [vmem:[#allocation2 + $0x70] sm:$0xff]
    %v353 = vld [vmem:[#allocation2 + $0x78] sm:$0xff]
    %v354 = vadd.f32 %v322, %v338
    %v355 = vadd.f32 %v323, %v339
    %v356 = vadd.f32 %v324, %v340
    %v357 = vadd.f32 %v325, %v341
    %v358 = vadd.f32 %v326, %v342
    %v359 = vadd.f32 %v327, %v343
    %v360 = vadd.f32 %v328, %v344
    %v361 = vadd.f32 %v329, %v345
    %v362 = vadd.f32 %v330, %v346
    %v363 = vadd.f32 %v331, %v347
    %v364 = vadd.f32 %v332, %v348
    %v365 = vadd.f32 %v333, %v349
    %v366 = vadd.f32 %v334, %v350
    %v367 = vadd.f32 %v335, %v351
    %v368 = vadd.f32 %v336, %v352
    %v369 = vadd.f32 %v337, %v353
    %v370 = vld [vmem:[%s3] sm:$0xff]
    %v371 = vld [vmem:[%s3 + $0x8] sm:$0xff]
    %v372 = vld [vmem:[%s3 + $0x10] sm:$0xff]
    %v373 = vld [vmem:[%s3 + $0x18] sm:$0xff]
    %v374 = vld [vmem:[%s3 + $0x20] sm:$0xff]
    %v375 = vld [vmem:[%s3 + $0x28] sm:$0xff]
    %v376 = vld [vmem:[%s3 + $0x30] sm:$0xff]
    %v377 = vld [vmem:[%s3 + $0x38] sm:$0xff]
    %v378 = vld [vmem:[%s3 + $0x40] sm:$0xff]
    %v379 = vld [vmem:[%s3 + $0x48] sm:$0xff]
    %v380 = vld [vmem:[%s3 + $0x50] sm:$0xff]
    %v381 = vld [vmem:[%s3 + $0x58] sm:$0xff]
    %v382 = vld [vmem:[%s3 + $0x60] sm:$0xff]
    %v383 = vld [vmem:[%s3 + $0x68] sm:$0xff]
    %v384 = vld [vmem:[%s3 + $0x70] sm:$0xff]
    %v385 = vld [vmem:[%s3 + $0x78] sm:$0xff]
    %v386 = vld [vmem:[%s4] sm:$0x1]
    %388 = vset.pattern.permute.xlu0 0
    %389 = vperm.xlu0 %388, %v370
    %v390 = vpop.permute.xlu0 %389
    %393 = vset.pattern.permute.xlu0 0
    %394 = vperm.xlu0 %393, %v371
    %v395 = vpop.permute.xlu0 %394
    %398 = vset.pattern.permute.xlu0 0
    %399 = vperm.xlu0 %398, %v372
    %v400 = vpop.permute.xlu0 %399
    %403 = vset.pattern.permute.xlu0 0
    %404 = vperm.xlu0 %403, %v373
    %v405 = vpop.permute.xlu0 %404
    %408 = vset.pattern.permute.xlu0 0
    %409 = vperm.xlu0 %408, %v374
    %v410 = vpop.permute.xlu0 %409
    %413 = vset.pattern.permute.xlu0 0
    %414 = vperm.xlu0 %413, %v375
    %v415 = vpop.permute.xlu0 %414
    %418 = vset.pattern.permute.xlu0 0
    %419 = vperm.xlu0 %418, %v376
    %v420 = vpop.permute.xlu0 %419
    %423 = vset.pattern.permute.xlu0 0
    %424 = vperm.xlu0 %423, %v377
    %v425 = vpop.permute.xlu0 %424
    %428 = vset.pattern.permute.xlu0 0
    %429 = vperm.xlu0 %428, %v378
    %v430 = vpop.permute.xlu0 %429
    %433 = vset.pattern.permute.xlu0 0
    %434 = vperm.xlu0 %433, %v379
    %v435 = vpop.permute.xlu0 %434
    %438 = vset.pattern.permute.xlu0 0
    %439 = vperm.xlu0 %438, %v380
    %v440 = vpop.permute.xlu0 %439
    %443 = vset.pattern.permute.xlu0 0
    %444 = vperm.xlu0 %443, %v381
    %v445 = vpop.permute.xlu0 %444
    %448 = vset.pattern.permute.xlu0 0
    %449 = vperm.xlu0 %448, %v382
    %v450 = vpop.permute.xlu0 %449
    %453 = vset.pattern.permute.xlu0 0
    %454 = vperm.xlu0 %453, %v383
    %v455 = vpop.permute.xlu0 %454
    %458 = vset.pattern.permute.xlu0 0
    %459 = vperm.xlu0 %458, %v384
    %v460 = vpop.permute.xlu0 %459
    %463 = vset.pattern.permute.xlu0 0
    %464 = vperm.xlu0 %463, %v385
    %v465 = vpop.permute.xlu0 %464
    %v468 = vlaneseq
    %v469 = vshrl.u32 %v468, 7
    %v470 = vsub.s32 0, %v469
    %v471 = vrot.slane %v386, %v470
    %v473 = vmul.f32 %v390, %v471
    %v474 = vmul.f32 %v395, %v471
    %v475 = vmul.f32 %v400, %v471
    %v476 = vmul.f32 %v405, %v471
    %v477 = vmul.f32 %v410, %v471
    %v478 = vmul.f32 %v415, %v471
    %v479 = vmul.f32 %v420, %v471
    %v480 = vmul.f32 %v425, %v471
    %v481 = vmul.f32 %v430, %v471
    %v482 = vmul.f32 %v435, %v471
    %v483 = vmul.f32 %v440, %v471
    %v484 = vmul.f32 %v445, %v471
    %v485 = vmul.f32 %v450, %v471
    %v486 = vmul.f32 %v455, %v471
    %v487 = vmul.f32 %v460, %v471
    %v488 = vmul.f32 %v465, %v471
    %v489 = vadd.f32 %v354, %v473
    %v490 = vadd.f32 %v355, %v474
    %v491 = vadd.f32 %v356, %v475
    %v492 = vadd.f32 %v357, %v476
    %v493 = vadd.f32 %v358, %v477
    %v494 = vadd.f32 %v359, %v478
    %v495 = vadd.f32 %v360, %v479
    %v496 = vadd.f32 %v361, %v480
    %v497 = vadd.f32 %v362, %v481
    %v498 = vadd.f32 %v363, %v482
    %v499 = vadd.f32 %v364, %v483
    %v500 = vadd.f32 %v365, %v484
    %v501 = vadd.f32 %v366, %v485
    %v502 = vadd.f32 %v367, %v486
    %v503 = vadd.f32 %v368, %v487
    %v504 = vadd.f32 %v369, %v488
    %v505 = vmax.f32 %v489, 0.0
    %v506 = vmax.f32 %v490, 0.0
    %v507 = vmax.f32 %v491, 0.0
    %v508 = vmax.f32 %v492, 0.0
    %v509 = vmax.f32 %v493, 0.0
    %v510 = vmax.f32 %v494, 0.0
    %v511 = vmax.f32 %v495, 0.0
    %v512 = vmax.f32 %v496, 0.0
    %v513 = vmax.f32 %v497, 0.0
    %v514 = vmax.f32 %v498, 0.0
    %v515 = vmax.f32 %v499, 0.0
    %v516 = vmax.f32 %v500, 0.0
    %v517 = vmax.f32 %v501, 0.0
    %v518 = vmax.f32 %v502, 0.0
    %v519 = vmax.f32 %v503, 0.0
    %v520 = vmax.f32 %v504, 0.0
    %v521 = vpack.c.bf16 %v506, %v505
    %v522 = vpack.c.bf16 %v508, %v507
    %v523 = vpack.c.bf16 %v510, %v509
    %v524 = vpack.c.bf16 %v512, %v511
    %v525 = vpack.c.bf16 %v514, %v513
    %v526 = vpack.c.bf16 %v516, %v515
    %v527 = vpack.c.bf16 %v518, %v517
    %v528 = vpack.c.bf16 %v520, %v519
    %v529 = vld [vmem:[%s5] sm:$0xff]
    %v530 = vld [vmem:[%s5 + $0x8] sm:$0xff]
    %v531 = vld [vmem:[%s5 + $0x10] sm:$0xff]
    %v532 = vld [vmem:[%s5 + $0x18] sm:$0xff]
    %v533 = vld [vmem:[%s5 + $0x20] sm:$0xff]
    %v534 = vld [vmem:[%s5 + $0x28] sm:$0xff]
    %v535 = vld [vmem:[%s5 + $0x30] sm:$0xff]
    %v536 = vld [vmem:[%s5 + $0x38] sm:$0xff]
    %v537 = vld [vmem:[%s5 + $0x40] sm:$0xff]
    %v538 = vld [vmem:[%s5 + $0x48] sm:$0xff]
    %v539 = vld [vmem:[%s5 + $0x50] sm:$0xff]
    %v540 = vld [vmem:[%s5 + $0x58] sm:$0xff]
    %v541 = vld [vmem:[%s5 + $0x60] sm:$0xff]
    %v542 = vld [vmem:[%s5 + $0x68] sm:$0xff]
    %v543 = vld [vmem:[%s5 + $0x70] sm:$0xff]
    %v544 = vld [vmem:[%s5 + $0x78] sm:$0xff]
    %v561 = vunpack.c.l.b16 %v529
    %v562 = vunpack.c.h.b16 %v529
    %v563 = vunpack.c.l.b16 %v530
    %v564 = vunpack.c.h.b16 %v530
    %v565 = vunpack.c.l.b16 %v531
    %v566 = vunpack.c.h.b16 %v531
    %v567 = vunpack.c.l.b16 %v532
    %v568 = vunpack.c.h.b16 %v532
    %v569 = vunpack.c.l.b16 %v533
    %v570 = vunpack.c.h.b16 %v533
    %v571 = vunpack.c.l.b16 %v534
    %v572 = vunpack.c.h.b16 %v534
    %v573 = vunpack.c.l.b16 %v535
    %v574 = vunpack.c.h.b16 %v535
    %v575 = vunpack.c.l.b16 %v536
    %v576 = vunpack.c.h.b16 %v536
    %v577 = vunpack.c.l.b16 %v537
    %v578 = vunpack.c.h.b16 %v537
    %v579 = vunpack.c.l.b16 %v538
    %v580 = vunpack.c.h.b16 %v538
    %v581 = vunpack.c.l.b16 %v539
    %v582 = vunpack.c.h.b16 %v539
    %v583 = vunpack.c.l.b16 %v540
    %v584 = vunpack.c.h.b16 %v540
    %v585 = vunpack.c.l.b16 %v541
    %v586 = vunpack.c.h.b16 %v541
    %v587 = vunpack.c.l.b16 %v542
    %v588 = vunpack.c.h.b16 %v542
    %v589 = vunpack.c.l.b16 %v543
    %v590 = vunpack.c.h.b16 %v543
    %v591 = vunpack.c.l.b16 %v544
    %v592 = vunpack.c.h.b16 %v544
    %v593 = vpack.c.b16 %v563, %v561
    %v594 = vpack.c.b16 %v564, %v562
    %v595 = vpack.c.b16 %v567, %v565
    %v596 = vpack.c.b16 %v568, %v566
    %v597 = vpack.c.b16 %v571, %v569
    %v598 = vpack.c.b16 %v572, %v570
    %v599 = vpack.c.b16 %v575, %v573
    %v600 = vpack.c.b16 %v576, %v574
    %v601 = vpack.c.b16 %v579, %v577
    %v602 = vpack.c.b16 %v580, %v578
    %v603 = vpack.c.b16 %v583, %v581
    %v604 = vpack.c.b16 %v584, %v582
    %v605 = vpack.c.b16 %v587, %v585
    %v606 = vpack.c.b16 %v588, %v586
    %v607 = vpack.c.b16 %v591, %v589
    %v608 = vpack.c.b16 %v592, %v590
    %625 = vmatprep.subr.bf16.mxu0 %v608
    %626 = vmatpush1.bf16.msra.mxu0 %v607
    %627 = vmatprep.subr.bf16.mxu0 %v606
    %628 = vmatpush1.bf16.msra.mxu0 %v605
    %629 = vmatprep.subr.bf16.mxu0 %v604
    %630 = vmatpush1.bf16.msra.mxu0 %v603
    %631 = vmatprep.subr.bf16.mxu0 %v602
    %632 = vmatpush1.bf16.msra.mxu0 %v601
    %633 = vmatprep.subr.bf16.mxu0 %v600
    %634 = vmatpush1.bf16.msra.mxu0 %v599
    %635 = vmatprep.subr.bf16.mxu0 %v598
    %636 = vmatpush1.bf16.msra.mxu0 %v597
    %637 = vmatprep.subr.bf16.mxu0 %v596
    %638 = vmatpush1.bf16.msra.mxu0 %v595
    %639 = vmatprep.subr.bf16.mxu0 %v594
    %640 = vmatpush1.bf16.msra.mxu0 %v593
    %641 = vmatprep.subr.bf16.mxu0 0
    %642 = vmatpush2.bf16.msra.mxu0 0
    %643 = vmatprep.subr.bf16.mxu0 0
    %644 = vmatpush2.bf16.msra.mxu0 0
    %645 = vmatprep.subr.bf16.mxu0 0
    %646 = vmatpush2.bf16.msra.mxu0 0
    %647 = vmatprep.subr.bf16.mxu0 0
    %648 = vmatpush2.bf16.msra.mxu0 0
    %649 = vmatprep.subr.bf16.mxu0 0
    %650 = vmatpush2.bf16.msra.mxu0 0
    %651 = vmatprep.subr.bf16.mxu0 0
    %652 = vmatpush2.bf16.msra.mxu0 0
    %653 = vmatprep.subr.bf16.mxu0 0
    %654 = vmatpush2.bf16.msra.mxu0 0
    %655 = vmatprep.subr.bf16.mxu0 0
    %656 = vmatpush2.bf16.msra.mxu0 0
    %657 = vmatprep.mubr.bf16.mxu0 0
    %658 = vmatmul.mubr.bf16.gmra.mxu0 %v521
    %v659 = vpop.f32.mrf.mxu0
    %v660 = vadd.f32 0.0, %v659
    %v661 = vpop.f32.mrf.mxu0
    %v662 = vadd.f32 0.0, %v661
    %v663 = vpop.f32.mrf.mxu0
    %v664 = vadd.f32 0.0, %v663
    %v665 = vpop.f32.mrf.mxu0
    %v666 = vadd.f32 0.0, %v665
    %667 = vmatprep.mubr.bf16.mxu0 0
    %668 = vmatmul.mubr.bf16.gmra.mxu0 %v522
    %v669 = vpop.f32.mrf.mxu0
    %v670 = vadd.f32 0.0, %v669
    %v671 = vpop.f32.mrf.mxu0
    %v672 = vadd.f32 0.0, %v671
    %v673 = vpop.f32.mrf.mxu0
    %v674 = vadd.f32 0.0, %v673
    %v675 = vpop.f32.mrf.mxu0
    %v676 = vadd.f32 0.0, %v675
    %677 = vmatprep.mubr.bf16.mxu0 0
    %678 = vmatmul.mubr.bf16.gmra.mxu0 %v523
    %v679 = vpop.f32.mrf.mxu0
    %v680 = vadd.f32 0.0, %v679
    %v681 = vpop.f32.mrf.mxu0
    %v682 = vadd.f32 0.0, %v681
    %v683 = vpop.f32.mrf.mxu0
    %v684 = vadd.f32 0.0, %v683
    %v685 = vpop.f32.mrf.mxu0
    %v686 = vadd.f32 0.0, %v685
    %687 = vmatprep.mubr.bf16.mxu0 0
    %688 = vmatmul.mubr.bf16.gmra.mxu0 %v524
    %v689 = vpop.f32.mrf.mxu0
    %v690 = vadd.f32 0.0, %v689
    %v691 = vpop.f32.mrf.mxu0
    %v692 = vadd.f32 0.0, %v691
    %v693 = vpop.f32.mrf.mxu0
    %v694 = vadd.f32 0.0, %v693
    %v695 = vpop.f32.mrf.mxu0
    %v696 = vadd.f32 0.0, %v695
    %697 = vmatprep.mubr.bf16.mxu0 0
    %698 = vmatmul.mubr.bf16.gmra.mxu0 %v525
    %v699 = vpop.f32.mrf.mxu0
    %v700 = vadd.f32 0.0, %v699
    %v701 = vpop.f32.mrf.mxu0
    %v702 = vadd.f32 0.0, %v701
    %v703 = vpop.f32.mrf.mxu0
    %v704 = vadd.f32 0.0, %v703
    %v705 = vpop.f32.mrf.mxu0
    %v706 = vadd.f32 0.0, %v705
    %707 = vmatprep.mubr.bf16.mxu0 0
    %708 = vmatmul.mubr.bf16.gmra.mxu0 %v526
    %v709 = vpop.f32.mrf.mxu0
    %v710 = vadd.f32 0.0, %v709
    %v711 = vpop.f32.mrf.mxu0
    %v712 = vadd.f32 0.0, %v711
    %v713 = vpop.f32.mrf.mxu0
    %v714 = vadd.f32 0.0, %v713
    %v715 = vpop.f32.mrf.mxu0
    %v716 = vadd.f32 0.0, %v715
    %717 = vmatprep.mubr.bf16.mxu0 0
    %718 = vmatmul.mubr.bf16.gmra.mxu0 %v527
    %v719 = vpop.f32.mrf.mxu0
    %v720 = vadd.f32 0.0, %v719
    %v721 = vpop.f32.mrf.mxu0
    %v722 = vadd.f32 0.0, %v721
    %v723 = vpop.f32.mrf.mxu0
    %v724 = vadd.f32 0.0, %v723
    %v725 = vpop.f32.mrf.mxu0
    %v726 = vadd.f32 0.0, %v725
    %727 = vmatprep.mubr.bf16.mxu0 0
    %728 = vmatmul.mubr.bf16.gmra.mxu0 %v528
    %v729 = vpop.f32.mrf.mxu0
    %v730 = vadd.f32 0.0, %v729
    %v731 = vpop.f32.mrf.mxu0
    %v732 = vadd.f32 0.0, %v731
    %v733 = vpop.f32.mrf.mxu0
    %v734 = vadd.f32 0.0, %v733
    %v735 = vpop.f32.mrf.mxu0
    %v736 = vadd.f32 0.0, %v735
    %737 = vdwg.mxu0
    %738 = vst [vmem:[%s6] sm:$0xff] %v660
    %739 = vst [vmem:[%s6 + $0x8] sm:$0xff] %v664
    %740 = vst [vmem:[%s6 + $0x10] sm:$0xff] %v670
    %741 = vst [vmem:[%s6 + $0x18] sm:$0xff] %v674
    %742 = vst [vmem:[%s6 + $0x20] sm:$0xff] %v680
    %743 = vst [vmem:[%s6 + $0x28] sm:$0xff] %v684
    %744 = vst [vmem:[%s6 + $0x30] sm:$0xff] %v690
    %745 = vst [vmem:[%s6 + $0x38] sm:$0xff] %v694
    %746 = vst [vmem:[%s6 + $0x40] sm:$0xff] %v700
    %747 = vst [vmem:[%s6 + $0x48] sm:$0xff] %v704
    %748 = vst [vmem:[%s6 + $0x50] sm:$0xff] %v710
    %749 = vst [vmem:[%s6 + $0x58] sm:$0xff] %v714
    %750 = vst [vmem:[%s6 + $0x60] sm:$0xff] %v720
    %751 = vst [vmem:[%s6 + $0x68] sm:$0xff] %v724
    %752 = vst [vmem:[%s6 + $0x70] sm:$0xff] %v730
    %753 = vst [vmem:[%s6 + $0x78] sm:$0xff] %v734
    %v754 = vpack.c.bf16 %v666, %v662
    %v755 = vpack.c.bf16 %v676, %v672
    %v756 = vpack.c.bf16 %v686, %v682
    %v757 = vpack.c.bf16 %v696, %v692
    %v758 = vpack.c.bf16 %v706, %v702
    %v759 = vpack.c.bf16 %v716, %v712
    %v760 = vpack.c.bf16 %v726, %v722
    %v761 = vpack.c.bf16 %v736, %v732
    %v770 = vunpack.c.l.b16 %v754
    %v771 = vunpack.c.h.b16 %v754
    %v772 = vunpack.c.l.b16 %v755
    %v773 = vunpack.c.h.b16 %v755
    %v774 = vunpack.c.l.b16 %v756
    %v775 = vunpack.c.h.b16 %v756
    %v776 = vunpack.c.l.b16 %v757
    %v777 = vunpack.c.h.b16 %v757
    %v778 = vunpack.c.l.b16 %v758
    %v779 = vunpack.c.h.b16 %v758
    %v780 = vunpack.c.l.b16 %v759
    %v781 = vunpack.c.h.b16 %v759
    %v782 = vunpack.c.l.b16 %v760
    %v783 = vunpack.c.h.b16 %v760
    %v784 = vunpack.c.l.b16 %v761
    %v785 = vunpack.c.h.b16 %v761
    %v786 = vpack.c.b16 %v770, %v770
    %v787 = vpack.c.b16 %v771, %v771
    %v788 = vpack.c.b16 %v772, %v772
    %v789 = vpack.c.b16 %v773, %v773
    %v790 = vpack.c.b16 %v774, %v774
    %v791 = vpack.c.b16 %v775, %v775
    %v792 = vpack.c.b16 %v776, %v776
    %v793 = vpack.c.b16 %v777, %v777
    %v794 = vpack.c.b16 %v778, %v778
    %v795 = vpack.c.b16 %v779, %v779
    %v796 = vpack.c.b16 %v780, %v780
    %v797 = vpack.c.b16 %v781, %v781
    %v798 = vpack.c.b16 %v782, %v782
    %v799 = vpack.c.b16 %v783, %v783
    %v800 = vpack.c.b16 %v784, %v784
    %v801 = vpack.c.b16 %v785, %v785
    %818 = vst [vmem:[%s7] sm:$0xf] %v786
    %819 = vst [vmem:[%s7 + $0x4] sm:$0xf] %v787
    %820 = vst [vmem:[%s7 + $0x8] sm:$0xf] %v788
    %821 = vst [vmem:[%s7 + $0xc] sm:$0xf] %v789
    %822 = vst [vmem:[%s7 + $0x10] sm:$0xf] %v790
    %823 = vst [vmem:[%s7 + $0x14] sm:$0xf] %v791
    %824 = vst [vmem:[%s7 + $0x18] sm:$0xf] %v792
    %825 = vst [vmem:[%s7 + $0x1c] sm:$0xf] %v793
    %826 = vst [vmem:[%s7 + $0x20] sm:$0xf] %v794
    %827 = vst [vmem:[%s7 + $0x24] sm:$0xf] %v795
    %828 = vst [vmem:[%s7 + $0x28] sm:$0xf] %v796
    %829 = vst [vmem:[%s7 + $0x2c] sm:$0xf] %v797
    %830 = vst [vmem:[%s7 + $0x30] sm:$0xf] %v798
    %831 = vst [vmem:[%s7 + $0x34] sm:$0xf] %v799
    %832 = vst [vmem:[%s7 + $0x38] sm:$0xf] %v800
    %833 = vst [vmem:[%s7 + $0x3c] sm:$0xf] %v801
  $region33: #{gcn_forward.4} parent=0 // pred_fallthru
    _
  // Predicated region
  $region34: #{gcn_forward.4} parent=0 // pred_check
    _
  $region35: #{gcn_forward.4} parent=0 // pred_check_branch
    %835 = sbr.rel (0) target = $region37
  $region36: #{gcn_forward.4} parent=0 // pred_region
    _
  $region37: #{gcn_forward.4} parent=0 // pred_fallthru
    _
  // Predicated region
  $region38: #{gcn_forward.4} parent=0 // pred_check
    _
  $region39: #{gcn_forward.4} parent=0 // pred_check_branch
    %837 = sbr.rel (0) target = $region41
  $region40: #{gcn_forward.4} parent=0 // pred_region
    _
  $region41: #{gcn_forward.4} parent=0 // pred_fallthru
    _
  // Predicated region
  $region42: #{gcn_forward.4} parent=0 // pred_check
    _
  $region43: #{gcn_forward.4} parent=0 // pred_check_branch
    %839 = sbr.rel (0) target = $region45
  $region44: #{gcn_forward.4} parent=0 // pred_region
    _
  $region45: #{gcn_forward.4} parent=0 // pred_fallthru
    _
  // Predicated region
  $region46: #{gcn_forward.4} parent=0 // pred_check
    _
  $region47: #{gcn_forward.4} parent=0 // pred_check_branch
    %841 = sbr.rel (0) target = $region49
  $region48: #{gcn_forward.4} parent=0 // pred_region
    _
  $region49: #{gcn_forward.4} parent=0 // pred_fallthru
    _

</llo_original>
